<compile_context>
chip_gen: v7x
topology: tpu7x:2x2x1
jax: 0.10.0
libtpu: 0.0.40
codegen_flags: <defaults>
</compile_context>

<pallas_src>
import numpy as np
import jax
import jax.numpy as jnp
from jax.experimental import pallas as pl
from jax.experimental.pallas import tpu as pltpu

# ---------------------------------------------------------------------------
# Hash-grid encoder config (torch-ngp style: 16 levels x 2 features -> in_dim=32)
# ---------------------------------------------------------------------------
NUM_LEVELS = 16
LEVEL_DIM = 2
IN_DIM = NUM_LEVELS * LEVEL_DIM            # 32
BASE_RES = 16
DESIRED_RES = 512                          # desired_resolution = 512 * bound (bound=1)
LOG2_T = 12                                # small synthetic hash table (2**12 entries/level)
HASH_T = 1 << LOG2_T
NET_WIDTH = 32
DEGREE = 3
N_SPHERE = 1
SH_DIM = (DEGREE + 1) ** 2                 # 16
WS_DIM = 3 * 3 * 2 + 3 * 2 + N_SPHERE * 3 + 3   # 30

# fused (block-diagonal) MLP dims
FUSED_IN = 2 * IN_DIM                      # 64
FUSED_HID = 2 * NET_WIDTH                  # 64
FUSED_OUT = 64                             # 16 (shs) + 30 (ws) padded to 64

# SH constants (svox / plenoxels eval_sh)
C0 = 0.28209479177387814
C1 = 0.4886025119029199
C2 = (1.0925484305920792, -1.0925484305920792, 0.31539156525252005,
      -1.0925484305920792, 0.5462742152960396)
C3 = (-0.5900435899266435, 2.890611442640554, -0.4570457994644658,
      0.3731763325901154, -0.4570457994644658, 1.445305721320277,
      -0.5900435899266435)


# ---------------------------------------------------------------------------
# Plain-JAX glue: multi-resolution hash-grid encoding, ONE shared gather for
# both encoders (identical hash indices since x01 / resolutions are shared).
# ---------------------------------------------------------------------------
def hash_encode_fused(x01, table_cat, resolutions):
    """x01: [n,3] in [0,1]; table_cat: [L, T, 2*F] -> (xe [n,L*F], we [n,L*F])."""
    primes = jnp.array([1, 2654435761, 805459861], dtype=jnp.uint32)
    xe_outs, we_outs = [], []
    for lvl, res in enumerate(resolutions):
        pos = x01 * (res - 1)
        pos0f = jnp.floor(pos)
        frac = pos - pos0f
        pos0 = pos0f.astype(jnp.uint32)
        feat = jnp.zeros((x01.shape[0], 2 * LEVEL_DIM), jnp.float32)
        for corner in range(8):
            offs = np.array([(corner >> d) & 1 for d in range(3)], dtype=np.uint32)
            c = pos0 + jnp.asarray(offs)[None, :]
            idx = ((c[:, 0] * primes[0]) ^ (c[:, 1] * primes[1]) ^ (c[:, 2] * primes[2])) \
                  & jnp.uint32(HASH_T - 1)
            w = jnp.prod(jnp.where(jnp.asarray(offs)[None, :] == 1, frac, 1.0 - frac),
                         axis=-1, keepdims=True)
            feat = feat + w * table_cat[lvl][idx]
        xe_outs.append(feat[:, :LEVEL_DIM])
        we_outs.append(feat[:, LEVEL_DIM:])
    return jnp.concatenate(xe_outs, axis=-1), jnp.concatenate(we_outs, axis=-1)


# ---------------------------------------------------------------------------
# Pallas kernel: fused MLPs (bf16 MXU) + SH eval + per-point tiny matmul stack,
# all in points-on-lanes layout.
# ---------------------------------------------------------------------------
def _hash1sh_kernel(xw_ref, ds_ref, w_ref, b_ref, out_ref):
    # xw_ref : [64, tile]  bf16  (rows 0:32 = xe^T, rows 32:64 = we^T)
    # ds_ref : [3, tile]   f32   (un-normalized directions, transposed)
    # w_ref  : [192, 64]   bf16  (stacked transposed fused weights W1^T;W2^T;W3^T)
    # b_ref  : [64, 3]     f32   (fused biases, one column per layer)
    # out_ref: [3, tile]   f32
    xwT = xw_ref[...]

    wt1 = w_ref[0:FUSED_HID, :]
    wt2 = w_ref[FUSED_HID:2 * FUSED_HID, :]
    wt3 = w_ref[2 * FUSED_HID:3 * FUSED_HID, :]
    b1 = b_ref[:, 0:1]
    b2 = b_ref[:, 1:2]
    b3 = b_ref[:, 2:3]

    # ---- fused (block-diagonal) late_mlp + weight_mlp, bf16 MXU / f32 acc
    h = jnp.dot(wt1, xwT, preferred_element_type=jnp.float32) + b1
    h = jnp.maximum(h, 0.0).astype(jnp.bfloat16)
    h = jnp.dot(wt2, h, preferred_element_type=jnp.float32) + b2
    h = jnp.maximum(h, 0.0).astype(jnp.bfloat16)
    t = jnp.dot(wt3, h, preferred_element_type=jnp.float32) + b3      # [64, tile]
    # rows 0:16 = shs^T (late_mlp), rows 16:46 = ws^T (weight_mlp), rest zero.

    # ---- normalize direction (lane-dense [1, tile] rows)
    d = ds_ref[...]
    x, y, z = d[0:1, :], d[1:2, :], d[2:3, :]
    inv_n = jax.lax.rsqrt(x * x + y * y + z * z)
    x, y, z = x * inv_n, y * inv_n, z * inv_n

    # ---- eval_sh(degree=3) -> c0 [1, tile]
    sh = lambda i: t[i:i + 1, :]
    xx, yy, zz = x * x, y * y, z * z
    xy, yz, xz = x * y, y * z, x * z
    c0 = C0 * sh(0)
    c0 = c0 - C1 * y * sh(1) + C1 * z * sh(2) - C1 * x * sh(3)
    c0 = (c0 + C2[0] * xy * sh(4) + C2[1] * yz * sh(5)
          + C2[2] * (2.0 * zz - xx - yy) * sh(6)
          + C2[3] * xz * sh(7) + C2[4] * (xx - yy) * sh(8))
    c0 = (c0 + C3[0] * y * (3.0 * xx - yy) * sh(9) + C3[1] * xy * z * sh(10)
          + C3[2] * y * (4.0 * zz - xx - yy) * sh(11)
          + C3[3] * z * (2.0 * zz - 3.0 * xx - 3.0 * yy) * sh(12)
          + C3[4] * x * (4.0 * zz - xx - yy) * sh(13)
          + C3[5] * z * (xx - yy) * sh(14)
          + C3[6] * x * (xx - 3.0 * yy) * sh(15))

    # ---- per-point layer stack (each row is a lane-dense [1, tile] vector)
    wsr = lambda i: t[SH_DIM + i:SH_DIM + i + 1, :]

    # layer1: [n,1] x [n,1,3] + bias, ReLU   (ws[0:3] weights, ws[3:6] bias)
    r1 = [jnp.maximum(c0 * wsr(j) + wsr(3 + j), 0.0) for j in range(3)]

    # layer2: 3x3 + bias, ReLU               (ws[6:15] weights, ws[15:18] bias)
    r2 = []
    for j in range(3):
        acc = wsr(15 + j)
        for i in range(3):
            acc = acc + r1[i] * wsr(6 + 3 * i + j)
        r2.append(jnp.maximum(acc, 0.0))

    # layer3: 3x3 + bias, sigmoid            (ws[18:27] weights, ws[27:30] bias)
    rows = []
    for j in range(3):
        acc = wsr(27 + j)
        for i in range(3):
            acc = acc + r2[i] * wsr(18 + 3 * i + j)
        rows.append(acc)

    out_ref[...] = jax.nn.sigmoid(jnp.concatenate(rows, axis=0))


def pack_fused_params(mlp):
    """12 per-MLP params -> (bf16 weight slab [192,64], f32 bias slab [64,3])."""
    w1, b1, w2, b2, w3, b3, v1, c1, v2, c2, v3, c3 = mlp
    f32 = jnp.float32

    def block_diag(a, b):
        return jnp.block([[a, jnp.zeros((a.shape[0], b.shape[1]), f32)],
                          [jnp.zeros((b.shape[0], a.shape[1]), f32), b]])

    f1 = block_diag(w1, v1)                                    # [64, 64]
    f2 = block_diag(w2, v2)                                    # [64, 64]
    f3 = jnp.zeros((2 * NET_WIDTH, FUSED_OUT), f32)
    f3 = f3.at[:NET_WIDTH, :SH_DIM].set(w3)
    f3 = f3.at[NET_WIDTH:, SH_DIM:SH_DIM + WS_DIM].set(v3)     # [64, 64]

    w_slab = jnp.concatenate([f1.T, f2.T, f3.T], axis=0).astype(jnp.bfloat16)  # [192,64]

    bias1 = jnp.concatenate([b1[0], c1[0]])
    bias2 = jnp.concatenate([b2[0], c2[0]])
    bias3 = jnp.concatenate([b3[0], c3[0],
                             jnp.zeros((FUSED_OUT - SH_DIM - WS_DIM,), f32)])
    b_slab = jnp.stack([bias1, bias2, bias3], axis=1)          # [64, 3]
    return w_slab, b_slab


def _choose_tile(n, tile):
    """Multiple of 128, <= requested, and keep >= 2 grid steps when n allows."""
    tile = max(128, (min(tile, 4096) // 128) * 128)
    two_step = ((n + 255) // 256) * 128       # ceil(n/2) rounded up to 128
    return max(128, min(tile, two_step))


def hash1sh_pallas(xe, we, ds, fused_params, *, tile=1024):
    w_slab, b_slab = fused_params
    n = xe.shape[0]
    tile = _choose_tile(n, tile)
    n_pad = ((n + tile - 1) // tile) * tile

    xwT = jnp.concatenate([xe, we], axis=-1).T.astype(jnp.bfloat16)   # [64, n]
    dsT = ds.T                                                        # [3, n]
    if n_pad != n:
        pad = n_pad - n
        xwT = jnp.pad(xwT, ((0, 0), (0, pad)))
        dsT = jnp.pad(dsT, ((0, 0), (0, pad)), constant_values=1.0)   # avoid 0-norm

    col = lambda i: (0, i)
    fixed = lambda i: (0, 0)
    out = pl.pallas_call(
        _hash1sh_kernel,
        out_shape=jax.ShapeDtypeStruct((3, n_pad), jnp.float32),
        grid=(n_pad // tile,),
        in_specs=[pl.BlockSpec((FUSED_IN, tile), col),
                  pl.BlockSpec((3, tile), col),
                  pl.BlockSpec((3 * FUSED_HID, FUSED_IN), fixed),
                  pl.BlockSpec((FUSED_HID, 3), fixed)],
        out_specs=pl.BlockSpec((3, tile), col),
        compiler_params=pltpu.CompilerParams(dimension_semantics=("parallel",)),
    )(xwT, dsT, w_slab, b_slab)
    return out[:, :n].T


# ---------------------------------------------------------------------------
# Deterministic parameter init (xavier_uniform weights, zero biases,
# uniform(-1e-2, 1e-2) hash tables) and a plain-JAX reference for checking.
# ---------------------------------------------------------------------------
def _xavier(key, fan_in, fan_out):
    bound = float(np.sqrt(6.0 / (fan_in + fan_out)))
    return jax.random.uniform(key, (fan_in, fan_out), jnp.float32, -bound, bound)


def make_params(key):
    ks = jax.random.split(key, 8)
    enc_table = jax.random.uniform(ks[0], (NUM_LEVELS, HASH_T, LEVEL_DIM), jnp.float32, -1e-2, 1e-2)
    wenc_table = jax.random.uniform(ks[1], (NUM_LEVELS, HASH_T, LEVEL_DIM), jnp.float32, -1e-2, 1e-2)
    w1 = _xavier(ks[2], IN_DIM, NET_WIDTH)
    w2 = _xavier(ks[3], NET_WIDTH, NET_WIDTH)
    w3 = _xavier(ks[4], NET_WIDTH, SH_DIM)
    v1 = _xavier(ks[5], IN_DIM, NET_WIDTH)
    v2 = _xavier(ks[6], NET_WIDTH, NET_WIDTH)
    v3 = _xavier(ks[7], NET_WIDTH, WS_DIM)
    zeros = lambda d: jnp.zeros((1, d), jnp.float32)
    mlp = (w1, zeros(NET_WIDTH), w2, zeros(NET_WIDTH), w3, zeros(SH_DIM),
           v1, zeros(NET_WIDTH), v2, zeros(NET_WIDTH), v3, zeros(WS_DIM))
    return enc_table, wenc_table, mlp


def reference_forward(xe, we, ds, mlp):
    w1, b1, w2, b2, w3, b3, v1, c1, v2, c2, v3, c3 = mlp
    d = ds / jnp.linalg.norm(ds, axis=-1, keepdims=True)
    x, y, z = d[:, 0:1], d[:, 1:2], d[:, 2:3]
    h = jax.nn.relu(xe @ w1 + b1)
    h = jax.nn.relu(h @ w2 + b2)
    shs = h @ w3 + b3
    xx, yy, zz, xy, yz, xz = x * x, y * y, z * z, x * y, y * z, x * z
    sh = lambda i: shs[:, i:i + 1]
    res = C0 * sh(0) - C1 * y * sh(1) + C1 * z * sh(2) - C1 * x * sh(3)
    res += (C2[0] * xy * sh(4) + C2[1] * yz * sh(5) + C2[2] * (2 * zz - xx - yy) * sh(6)
            + C2[3] * xz * sh(7) + C2[4] * (xx - yy) * sh(8))
    res += (C3[0] * y * (3 * xx - yy) * sh(9) + C3[1] * xy * z * sh(10)
            + C3[2] * y * (4 * zz - xx - yy) * sh(11)
            + C3[3] * z * (2 * zz - 3 * xx - 3 * yy) * sh(12)
            + C3[4] * x * (4 * zz - xx - yy) * sh(13)
            + C3[5] * z * (xx - yy) * sh(14) + C3[6] * x * (xx - 3 * yy) * sh(15))
    g = jax.nn.relu(we @ v1 + c1)
    g = jax.nn.relu(g @ v2 + c2)
    ws = g @ v3 + c3
    n = xe.shape[0]
    c = jax.nn.relu(jnp.einsum('nk,nkj->nj', res, ws[:, 0:3].reshape(n, 1, 3)) + ws[:, 3:6])
    c = jax.nn.relu(jnp.einsum('ni,nij->nj', c, ws[:, 6:15].reshape(n, 3, 3)) + ws[:, 15:18])
    c = jnp.einsum('ni,nij->nj', c, ws[:, 18:27].reshape(n, 3, 3)) + ws[:, 27:30]
    return jax.nn.sigmoid(c)


def hash1sh_forward(xs, ds, enc_table, wenc_table, mlp):
    """xs in [-.5,.5], ds in [-1,1]; returns {'c_is': [n,3], 'sigma_is': None}."""
    xs_ = xs * 2.0                                   # -> [-1, 1]
    x01 = jnp.clip((xs_ + 1.0) * 0.5, 0.0, 1.0)      # grid-encoder input domain
    per_level_scale = (DESIRED_RES / BASE_RES) ** (1.0 / (NUM_LEVELS - 1))
    resolutions = [int(np.floor(BASE_RES * per_level_scale ** l)) for l in range(NUM_LEVELS)]
    table_cat = jnp.concatenate([enc_table, wenc_table], axis=-1)    # [L, T, 4]
    xe, we = hash_encode_fused(x01, table_cat, resolutions)          # [n,32], [n,32]
    fused = pack_fused_params(mlp)
    c_is = hash1sh_pallas(xe, we, ds, fused)
    return {'c_is': c_is, 'sigma_is': None}, (xe, we)


if __name__ == "__main__":
    key = jax.random.PRNGKey(0)
    k_x, k_d, k_p = jax.random.split(key, 3)

    n = 256
    xs = jax.random.uniform(k_x, (n, 3), jnp.float32, -0.5, 0.5)
    ds = jax.random.uniform(k_d, (n, 3), jnp.float32, -1.0, 1.0)

    enc_table, wenc_table, mlp = make_params(k_p)

    fwd = jax.jit(hash1sh_forward)
    out, (xe, we) = fwd(xs, ds, enc_table, wenc_table, mlp)
    c_is = jax.block_until_ready(out['c_is'])
    assert c_is.shape == (n, 3) and c_is.dtype == jnp.float32

    ref = jax.block_until_ready(reference_forward(xe, we, ds, mlp))
    np.testing.assert_allclose(np.asarray(c_is), np.asarray(ref), rtol=2e-2, atol=2e-3)

    print("KERNEL_OK")
</pallas_src>

<mosaic_0001>
module attributes {stable_mosaic.version = 11 : i64} {
  func.func @_hash1sh_kernel(%arg0: i32, %arg1: memref<64x128xbf16, #tpu.memory_space<vmem>>, %arg2: memref<3x128xf32, #tpu.memory_space<vmem>>, %arg3: memref<192x64xbf16, #tpu.memory_space<vmem>>, %arg4: memref<64x3xf32, #tpu.memory_space<vmem>>, %arg5: memref<3x128xf32, #tpu.memory_space<vmem>>) attributes {dimension_semantics = [#tpu.dimension_semantics<parallel>], iteration_bounds = array<i64: 2>, scalar_prefetch = 0 : i64, scratch_operands = 0 : i64, tpu.core_type = #tpu.core_type<tc>, window_params = [{transform_indices = @transform_0, window_bounds = array<i64: 64, 128>}, {transform_indices = @transform_1, window_bounds = array<i64: 3, 128>}, {pipeline_mode = #tpu.pipeline_mode<synchronous>, transform_indices = @transform_2, window_bounds = array<i64: 192, 64>}, {pipeline_mode = #tpu.pipeline_mode<synchronous>, transform_indices = @transform_3, window_bounds = array<i64: 64, 3>}, {transform_indices = @transform_4, window_bounds = array<i64: 3, 128>}]} {
    %c0 = arith.constant 0 : index
    %c0_0 = arith.constant 0 : index
    %0 = vector.load %arg1[%c0, %c0_0] : memref<64x128xbf16, #tpu.memory_space<vmem>>, vector<64x128xbf16>
    %c0_1 = arith.constant 0 : index
    %c0_2 = arith.constant 0 : index
    %1 = vector.load %arg3[%c0_1, %c0_2] : memref<192x64xbf16, #tpu.memory_space<vmem>>, vector<64x64xbf16>
    %c64 = arith.constant 64 : index
    %c0_3 = arith.constant 0 : index
    %2 = vector.load %arg3[%c64, %c0_3] : memref<192x64xbf16, #tpu.memory_space<vmem>>, vector<64x64xbf16>
    %c128 = arith.constant 128 : index
    %c0_4 = arith.constant 0 : index
    %3 = vector.load %arg3[%c128, %c0_4] : memref<192x64xbf16, #tpu.memory_space<vmem>>, vector<64x64xbf16>
    %c0_5 = arith.constant 0 : index
    %c0_6 = arith.constant 0 : index
    %4 = vector.load %arg4[%c0_5, %c0_6] : memref<64x3xf32, #tpu.memory_space<vmem>>, vector<64x1xf32>
    %c0_7 = arith.constant 0 : index
    %c1 = arith.constant 1 : index
    %5 = vector.load %arg4[%c0_7, %c1] : memref<64x3xf32, #tpu.memory_space<vmem>>, vector<64x1xf32>
    %c0_8 = arith.constant 0 : index
    %c2 = arith.constant 2 : index
    %6 = vector.load %arg4[%c0_8, %c2] : memref<64x3xf32, #tpu.memory_space<vmem>>, vector<64x1xf32>
    %cst = arith.constant dense<0.000000e+00> : vector<64x128xf32>
    %7 = tpu.matmul %1, %0, %cst {dimension_numbers = #tpu.dot_dimension_numbers<[1], [0], [0], [1], [0, 0, 1, 1], [], []>} : vector<64x64xbf16>, vector<64x128xbf16>, vector<64x128xf32> -> vector<64x128xf32>
    %8 = vector.broadcast %4 : vector<64x1xf32> to vector<64x128xf32>
    %9 = arith.addf %7, %8 : vector<64x128xf32>
    %cst_9 = arith.constant 0.000000e+00 : f32
    %10 = vector.broadcast %cst_9 : f32 to vector<64x128xf32>
    %11 = arith.maximumf %9, %10 : vector<64x128xf32>
    %12 = arith.truncf %11 : vector<64x128xf32> to vector<64x128xbf16>
    %cst_10 = arith.constant dense<0.000000e+00> : vector<64x128xf32>
    %13 = tpu.matmul %2, %12, %cst_10 {dimension_numbers = #tpu.dot_dimension_numbers<[1], [0], [0], [1], [0, 0, 1, 1], [], []>} : vector<64x64xbf16>, vector<64x128xbf16>, vector<64x128xf32> -> vector<64x128xf32>
    %14 = vector.broadcast %5 : vector<64x1xf32> to vector<64x128xf32>
    %15 = arith.addf %13, %14 : vector<64x128xf32>
    %cst_11 = arith.constant 0.000000e+00 : f32
    %16 = vector.broadcast %cst_11 : f32 to vector<64x128xf32>
    %17 = arith.maximumf %15, %16 : vector<64x128xf32>
    %18 = arith.truncf %17 : vector<64x128xf32> to vector<64x128xbf16>
    %cst_12 = arith.constant dense<0.000000e+00> : vector<64x128xf32>
    %19 = tpu.matmul %3, %18, %cst_12 {dimension_numbers = #tpu.dot_dimension_numbers<[1], [0], [0], [1], [0, 0, 1, 1], [], []>} : vector<64x64xbf16>, vector<64x128xbf16>, vector<64x128xf32> -> vector<64x128xf32>
    %20 = vector.broadcast %6 : vector<64x1xf32> to vector<64x128xf32>
    %21 = arith.addf %19, %20 : vector<64x128xf32>
    %c0_13 = arith.constant 0 : index
    %c0_14 = arith.constant 0 : index
    %22 = vector.load %arg2[%c0_13, %c0_14] : memref<3x128xf32, #tpu.memory_space<vmem>>, vector<3x128xf32>
    %23 = vector.extract_strided_slice %22 {offsets = [0, 0], sizes = [1, 128], strides = [1, 1]} : vector<3x128xf32> to vector<1x128xf32>
    %24 = vector.extract_strided_slice %22 {offsets = [1, 0], sizes = [1, 128], strides = [1, 1]} : vector<3x128xf32> to vector<1x128xf32>
    %25 = vector.extract_strided_slice %22 {offsets = [2, 0], sizes = [1, 128], strides = [1, 1]} : vector<3x128xf32> to vector<1x128xf32>
    %26 = arith.mulf %23, %23 : vector<1x128xf32>
    %27 = arith.mulf %24, %24 : vector<1x128xf32>
    %28 = arith.addf %26, %27 : vector<1x128xf32>
    %29 = arith.mulf %25, %25 : vector<1x128xf32>
    %30 = arith.addf %28, %29 : vector<1x128xf32>
    %31 = math.rsqrt %30 : vector<1x128xf32>
    %32 = arith.mulf %23, %31 : vector<1x128xf32>
    %33 = arith.mulf %24, %31 : vector<1x128xf32>
    %34 = arith.mulf %25, %31 : vector<1x128xf32>
    %35 = arith.mulf %32, %32 : vector<1x128xf32>
    %36 = arith.mulf %33, %33 : vector<1x128xf32>
    %37 = arith.mulf %34, %34 : vector<1x128xf32>
    %38 = arith.mulf %32, %33 : vector<1x128xf32>
    %39 = arith.mulf %33, %34 : vector<1x128xf32>
    %40 = arith.mulf %32, %34 : vector<1x128xf32>
    %41 = vector.extract_strided_slice %21 {offsets = [0, 0], sizes = [1, 128], strides = [1, 1]} : vector<64x128xf32> to vector<1x128xf32>
    %cst_15 = arith.constant 0.282094806 : f32
    %42 = vector.broadcast %cst_15 : f32 to vector<1x128xf32>
    %43 = arith.mulf %42, %41 : vector<1x128xf32>
    %cst_16 = arith.constant 0.488602519 : f32
    %44 = vector.broadcast %cst_16 : f32 to vector<1x128xf32>
    %45 = arith.mulf %44, %33 : vector<1x128xf32>
    %46 = vector.extract_strided_slice %21 {offsets = [1, 0], sizes = [1, 128], strides = [1, 1]} : vector<64x128xf32> to vector<1x128xf32>
    %47 = arith.mulf %45, %46 : vector<1x128xf32>
    %48 = arith.subf %43, %47 : vector<1x128xf32>
    %cst_17 = arith.constant 0.488602519 : f32
    %49 = vector.broadcast %cst_17 : f32 to vector<1x128xf32>
    %50 = arith.mulf %49, %34 : vector<1x128xf32>
    %51 = vector.extract_strided_slice %21 {offsets = [2, 0], sizes = [1, 128], strides = [1, 1]} : vector<64x128xf32> to vector<1x128xf32>
    %52 = arith.mulf %50, %51 : vector<1x128xf32>
    %53 = arith.addf %48, %52 : vector<1x128xf32>
    %cst_18 = arith.constant 0.488602519 : f32
    %54 = vector.broadcast %cst_18 : f32 to vector<1x128xf32>
    %55 = arith.mulf %54, %32 : vector<1x128xf32>
    %56 = vector.extract_strided_slice %21 {offsets = [3, 0], sizes = [1, 128], strides = [1, 1]} : vector<64x128xf32> to vector<1x128xf32>
    %57 = arith.mulf %55, %56 : vector<1x128xf32>
    %58 = arith.subf %53, %57 : vector<1x128xf32>
    %cst_19 = arith.constant 1.09254849 : f32
    %59 = vector.broadcast %cst_19 : f32 to vector<1x128xf32>
    %60 = arith.mulf %59, %38 : vector<1x128xf32>
    %61 = vector.extract_strided_slice %21 {offsets = [4, 0], sizes = [1, 128], strides = [1, 1]} : vector<64x128xf32> to vector<1x128xf32>
    %62 = arith.mulf %60, %61 : vector<1x128xf32>
    %63 = arith.addf %58, %62 : vector<1x128xf32>
    %cst_20 = arith.constant -1.09254849 : f32
    %64 = vector.broadcast %cst_20 : f32 to vector<1x128xf32>
    %65 = arith.mulf %64, %39 : vector<1x128xf32>
    %66 = vector.extract_strided_slice %21 {offsets = [5, 0], sizes = [1, 128], strides = [1, 1]} : vector<64x128xf32> to vector<1x128xf32>
    %67 = arith.mulf %65, %66 : vector<1x128xf32>
    %68 = arith.addf %63, %67 : vector<1x128xf32>
    %cst_21 = arith.constant 2.000000e+00 : f32
    %69 = vector.broadcast %cst_21 : f32 to vector<1x128xf32>
    %70 = arith.mulf %69, %37 : vector<1x128xf32>
    %71 = arith.subf %70, %35 : vector<1x128xf32>
    %72 = arith.subf %71, %36 : vector<1x128xf32>
    %cst_22 = arith.constant 0.31539157 : f32
    %73 = vector.broadcast %cst_22 : f32 to vector<1x128xf32>
    %74 = arith.mulf %73, %72 : vector<1x128xf32>
    %75 = vector.extract_strided_slice %21 {offsets = [6, 0], sizes = [1, 128], strides = [1, 1]} : vector<64x128xf32> to vector<1x128xf32>
    %76 = arith.mulf %74, %75 : vector<1x128xf32>
    %77 = arith.addf %68, %76 : vector<1x128xf32>
    %cst_23 = arith.constant -1.09254849 : f32
    %78 = vector.broadcast %cst_23 : f32 to vector<1x128xf32>
    %79 = arith.mulf %78, %40 : vector<1x128xf32>
    %80 = vector.extract_strided_slice %21 {offsets = [7, 0], sizes = [1, 128], strides = [1, 1]} : vector<64x128xf32> to vector<1x128xf32>
    %81 = arith.mulf %79, %80 : vector<1x128xf32>
    %82 = arith.addf %77, %81 : vector<1x128xf32>
    %83 = arith.subf %35, %36 : vector<1x128xf32>
    %cst_24 = arith.constant 0.546274245 : f32
    %84 = vector.broadcast %cst_24 : f32 to vector<1x128xf32>
    %85 = arith.mulf %84, %83 : vector<1x128xf32>
    %86 = vector.extract_strided_slice %21 {offsets = [8, 0], sizes = [1, 128], strides = [1, 1]} : vector<64x128xf32> to vector<1x128xf32>
    %87 = arith.mulf %85, %86 : vector<1x128xf32>
    %88 = arith.addf %82, %87 : vector<1x128xf32>
    %cst_25 = arith.constant -0.590043604 : f32
    %89 = vector.broadcast %cst_25 : f32 to vector<1x128xf32>
    %90 = arith.mulf %89, %33 : vector<1x128xf32>
    %cst_26 = arith.constant 3.000000e+00 : f32
    %91 = vector.broadcast %cst_26 : f32 to vector<1x128xf32>
    %92 = arith.mulf %91, %35 : vector<1x128xf32>
    %93 = arith.subf %92, %36 : vector<1x128xf32>
    %94 = arith.mulf %90, %93 : vector<1x128xf32>
    %95 = vector.extract_strided_slice %21 {offsets = [9, 0], sizes = [1, 128], strides = [1, 1]} : vector<64x128xf32> to vector<1x128xf32>
    %96 = arith.mulf %94, %95 : vector<1x128xf32>
    %97 = arith.addf %88, %96 : vector<1x128xf32>
    %cst_27 = arith.constant 2.89061141 : f32
    %98 = vector.broadcast %cst_27 : f32 to vector<1x128xf32>
    %99 = arith.mulf %98, %38 : vector<1x128xf32>
    %100 = arith.mulf %99, %34 : vector<1x128xf32>
    %101 = vector.extract_strided_slice %21 {offsets = [10, 0], sizes = [1, 128], strides = [1, 1]} : vector<64x128xf32> to vector<1x128xf32>
    %102 = arith.mulf %100, %101 : vector<1x128xf32>
    %103 = arith.addf %97, %102 : vector<1x128xf32>
    %cst_28 = arith.constant -0.457045794 : f32
    %104 = vector.broadcast %cst_28 : f32 to vector<1x128xf32>
    %105 = arith.mulf %104, %33 : vector<1x128xf32>
    %cst_29 = arith.constant 4.000000e+00 : f32
    %106 = vector.broadcast %cst_29 : f32 to vector<1x128xf32>
    %107 = arith.mulf %106, %37 : vector<1x128xf32>
    %108 = arith.subf %107, %35 : vector<1x128xf32>
    %109 = arith.subf %108, %36 : vector<1x128xf32>
    %110 = arith.mulf %105, %109 : vector<1x128xf32>
    %111 = vector.extract_strided_slice %21 {offsets = [11, 0], sizes = [1, 128], strides = [1, 1]} : vector<64x128xf32> to vector<1x128xf32>
    %112 = arith.mulf %110, %111 : vector<1x128xf32>
    %113 = arith.addf %103, %112 : vector<1x128xf32>
    %cst_30 = arith.constant 0.373176336 : f32
    %114 = vector.broadcast %cst_30 : f32 to vector<1x128xf32>
    %115 = arith.mulf %114, %34 : vector<1x128xf32>
    %cst_31 = arith.constant 2.000000e+00 : f32
    %116 = vector.broadcast %cst_31 : f32 to vector<1x128xf32>
    %117 = arith.mulf %116, %37 : vector<1x128xf32>
    %cst_32 = arith.constant 3.000000e+00 : f32
    %118 = vector.broadcast %cst_32 : f32 to vector<1x128xf32>
    %119 = arith.mulf %118, %35 : vector<1x128xf32>
    %120 = arith.subf %117, %119 : vector<1x128xf32>
    %cst_33 = arith.constant 3.000000e+00 : f32
    %121 = vector.broadcast %cst_33 : f32 to vector<1x128xf32>
    %122 = arith.mulf %121, %36 : vector<1x128xf32>
    %123 = arith.subf %120, %122 : vector<1x128xf32>
    %124 = arith.mulf %115, %123 : vector<1x128xf32>
    %125 = vector.extract_strided_slice %21 {offsets = [12, 0], sizes = [1, 128], strides = [1, 1]} : vector<64x128xf32> to vector<1x128xf32>
    %126 = arith.mulf %124, %125 : vector<1x128xf32>
    %127 = arith.addf %113, %126 : vector<1x128xf32>
    %cst_34 = arith.constant -0.457045794 : f32
    %128 = vector.broadcast %cst_34 : f32 to vector<1x128xf32>
    %129 = arith.mulf %128, %32 : vector<1x128xf32>
    %cst_35 = arith.constant 4.000000e+00 : f32
    %130 = vector.broadcast %cst_35 : f32 to vector<1x128xf32>
    %131 = arith.mulf %130, %37 : vector<1x128xf32>
    %132 = arith.subf %131, %35 : vector<1x128xf32>
    %133 = arith.subf %132, %36 : vector<1x128xf32>
    %134 = arith.mulf %129, %133 : vector<1x128xf32>
    %135 = vector.extract_strided_slice %21 {offsets = [13, 0], sizes = [1, 128], strides = [1, 1]} : vector<64x128xf32> to vector<1x128xf32>
    %136 = arith.mulf %134, %135 : vector<1x128xf32>
    %137 = arith.addf %127, %136 : vector<1x128xf32>
    %cst_36 = arith.constant 1.44530571 : f32
    %138 = vector.broadcast %cst_36 : f32 to vector<1x128xf32>
    %139 = arith.mulf %138, %34 : vector<1x128xf32>
    %140 = arith.subf %35, %36 : vector<1x128xf32>
    %141 = arith.mulf %139, %140 : vector<1x128xf32>
    %142 = vector.extract_strided_slice %21 {offsets = [14, 0], sizes = [1, 128], strides = [1, 1]} : vector<64x128xf32> to vector<1x128xf32>
    %143 = arith.mulf %141, %142 : vector<1x128xf32>
    %144 = arith.addf %137, %143 : vector<1x128xf32>
    %cst_37 = arith.constant -0.590043604 : f32
    %145 = vector.broadcast %cst_37 : f32 to vector<1x128xf32>
    %146 = arith.mulf %145, %32 : vector<1x128xf32>
    %cst_38 = arith.constant 3.000000e+00 : f32
    %147 = vector.broadcast %cst_38 : f32 to vector<1x128xf32>
    %148 = arith.mulf %147, %36 : vector<1x128xf32>
    %149 = arith.subf %35, %148 : vector<1x128xf32>
    %150 = arith.mulf %146, %149 : vector<1x128xf32>
    %151 = vector.extract_strided_slice %21 {offsets = [15, 0], sizes = [1, 128], strides = [1, 1]} : vector<64x128xf32> to vector<1x128xf32>
    %152 = arith.mulf %150, %151 : vector<1x128xf32>
    %153 = arith.addf %144, %152 : vector<1x128xf32>
    %154 = vector.extract_strided_slice %21 {offsets = [16, 0], sizes = [1, 128], strides = [1, 1]} : vector<64x128xf32> to vector<1x128xf32>
    %155 = arith.mulf %153, %154 : vector<1x128xf32>
    %156 = vector.extract_strided_slice %21 {offsets = [19, 0], sizes = [1, 128], strides = [1, 1]} : vector<64x128xf32> to vector<1x128xf32>
    %157 = arith.addf %155, %156 : vector<1x128xf32>
    %cst_39 = arith.constant 0.000000e+00 : f32
    %158 = vector.broadcast %cst_39 : f32 to vector<1x128xf32>
    %159 = arith.maximumf %157, %158 : vector<1x128xf32>
    %160 = vector.extract_strided_slice %21 {offsets = [17, 0], sizes = [1, 128], strides = [1, 1]} : vector<64x128xf32> to vector<1x128xf32>
    %161 = arith.mulf %153, %160 : vector<1x128xf32>
    %162 = vector.extract_strided_slice %21 {offsets = [20, 0], sizes = [1, 128], strides = [1, 1]} : vector<64x128xf32> to vector<1x128xf32>
    %163 = arith.addf %161, %162 : vector<1x128xf32>
    %cst_40 = arith.constant 0.000000e+00 : f32
    %164 = vector.broadcast %cst_40 : f32 to vector<1x128xf32>
    %165 = arith.maximumf %163, %164 : vector<1x128xf32>
    %166 = vector.extract_strided_slice %21 {offsets = [18, 0], sizes = [1, 128], strides = [1, 1]} : vector<64x128xf32> to vector<1x128xf32>
    %167 = arith.mulf %153, %166 : vector<1x128xf32>
    %168 = vector.extract_strided_slice %21 {offsets = [21, 0], sizes = [1, 128], strides = [1, 1]} : vector<64x128xf32> to vector<1x128xf32>
    %169 = arith.addf %167, %168 : vector<1x128xf32>
    %cst_41 = arith.constant 0.000000e+00 : f32
    %170 = vector.broadcast %cst_41 : f32 to vector<1x128xf32>
    %171 = arith.maximumf %169, %170 : vector<1x128xf32>
    %172 = vector.extract_strided_slice %21 {offsets = [31, 0], sizes = [1, 128], strides = [1, 1]} : vector<64x128xf32> to vector<1x128xf32>
    %173 = vector.extract_strided_slice %21 {offsets = [22, 0], sizes = [1, 128], strides = [1, 1]} : vector<64x128xf32> to vector<1x128xf32>
    %174 = arith.mulf %159, %173 : vector<1x128xf32>
    %175 = arith.addf %172, %174 : vector<1x128xf32>
    %176 = vector.extract_strided_slice %21 {offsets = [25, 0], sizes = [1, 128], strides = [1, 1]} : vector<64x128xf32> to vector<1x128xf32>
    %177 = arith.mulf %165, %176 : vector<1x128xf32>
    %178 = arith.addf %175, %177 : vector<1x128xf32>
    %179 = vector.extract_strided_slice %21 {offsets = [28, 0], sizes = [1, 128], strides = [1, 1]} : vector<64x128xf32> to vector<1x128xf32>
    %180 = arith.mulf %171, %179 : vector<1x128xf32>
    %181 = arith.addf %178, %180 : vector<1x128xf32>
    %cst_42 = arith.constant 0.000000e+00 : f32
    %182 = vector.broadcast %cst_42 : f32 to vector<1x128xf32>
    %183 = arith.maximumf %181, %182 : vector<1x128xf32>
    %184 = vector.extract_strided_slice %21 {offsets = [32, 0], sizes = [1, 128], strides = [1, 1]} : vector<64x128xf32> to vector<1x128xf32>
    %185 = vector.extract_strided_slice %21 {offsets = [23, 0], sizes = [1, 128], strides = [1, 1]} : vector<64x128xf32> to vector<1x128xf32>
    %186 = arith.mulf %159, %185 : vector<1x128xf32>
    %187 = arith.addf %184, %186 : vector<1x128xf32>
    %188 = vector.extract_strided_slice %21 {offsets = [26, 0], sizes = [1, 128], strides = [1, 1]} : vector<64x128xf32> to vector<1x128xf32>
    %189 = arith.mulf %165, %188 : vector<1x128xf32>
    %190 = arith.addf %187, %189 : vector<1x128xf32>
    %191 = vector.extract_strided_slice %21 {offsets = [29, 0], sizes = [1, 128], strides = [1, 1]} : vector<64x128xf32> to vector<1x128xf32>
    %192 = arith.mulf %171, %191 : vector<1x128xf32>
    %193 = arith.addf %190, %192 : vector<1x128xf32>
    %cst_43 = arith.constant 0.000000e+00 : f32
    %194 = vector.broadcast %cst_43 : f32 to vector<1x128xf32>
    %195 = arith.maximumf %193, %194 : vector<1x128xf32>
    %196 = vector.extract_strided_slice %21 {offsets = [33, 0], sizes = [1, 128], strides = [1, 1]} : vector<64x128xf32> to vector<1x128xf32>
    %197 = vector.extract_strided_slice %21 {offsets = [24, 0], sizes = [1, 128], strides = [1, 1]} : vector<64x128xf32> to vector<1x128xf32>
    %198 = arith.mulf %159, %197 : vector<1x128xf32>
    %199 = arith.addf %196, %198 : vector<1x128xf32>
    %200 = vector.extract_strided_slice %21 {offsets = [27, 0], sizes = [1, 128], strides = [1, 1]} : vector<64x128xf32> to vector<1x128xf32>
    %201 = arith.mulf %165, %200 : vector<1x128xf32>
    %202 = arith.addf %199, %201 : vector<1x128xf32>
    %203 = vector.extract_strided_slice %21 {offsets = [30, 0], sizes = [1, 128], strides = [1, 1]} : vector<64x128xf32> to vector<1x128xf32>
    %204 = arith.mulf %171, %203 : vector<1x128xf32>
    %205 = arith.addf %202, %204 : vector<1x128xf32>
    %cst_44 = arith.constant 0.000000e+00 : f32
    %206 = vector.broadcast %cst_44 : f32 to vector<1x128xf32>
    %207 = arith.maximumf %205, %206 : vector<1x128xf32>
    %208 = vector.extract_strided_slice %21 {offsets = [43, 0], sizes = [1, 128], strides = [1, 1]} : vector<64x128xf32> to vector<1x128xf32>
    %209 = vector.extract_strided_slice %21 {offsets = [34, 0], sizes = [1, 128], strides = [1, 1]} : vector<64x128xf32> to vector<1x128xf32>
    %210 = arith.mulf %183, %209 : vector<1x128xf32>
    %211 = arith.addf %208, %210 : vector<1x128xf32>
    %212 = vector.extract_strided_slice %21 {offsets = [37, 0], sizes = [1, 128], strides = [1, 1]} : vector<64x128xf32> to vector<1x128xf32>
    %213 = arith.mulf %195, %212 : vector<1x128xf32>
    %214 = arith.addf %211, %213 : vector<1x128xf32>
    %215 = vector.extract_strided_slice %21 {offsets = [40, 0], sizes = [1, 128], strides = [1, 1]} : vector<64x128xf32> to vector<1x128xf32>
    %216 = arith.mulf %207, %215 : vector<1x128xf32>
    %217 = arith.addf %214, %216 : vector<1x128xf32>
    %218 = vector.extract_strided_slice %21 {offsets = [44, 0], sizes = [1, 128], strides = [1, 1]} : vector<64x128xf32> to vector<1x128xf32>
    %219 = vector.extract_strided_slice %21 {offsets = [35, 0], sizes = [1, 128], strides = [1, 1]} : vector<64x128xf32> to vector<1x128xf32>
    %220 = arith.mulf %183, %219 : vector<1x128xf32>
    %221 = arith.addf %218, %220 : vector<1x128xf32>
    %222 = vector.extract_strided_slice %21 {offsets = [38, 0], sizes = [1, 128], strides = [1, 1]} : vector<64x128xf32> to vector<1x128xf32>
    %223 = arith.mulf %195, %222 : vector<1x128xf32>
    %224 = arith.addf %221, %223 : vector<1x128xf32>
    %225 = vector.extract_strided_slice %21 {offsets = [41, 0], sizes = [1, 128], strides = [1, 1]} : vector<64x128xf32> to vector<1x128xf32>
    %226 = arith.mulf %207, %225 : vector<1x128xf32>
    %227 = arith.addf %224, %226 : vector<1x128xf32>
    %228 = vector.extract_strided_slice %21 {offsets = [45, 0], sizes = [1, 128], strides = [1, 1]} : vector<64x128xf32> to vector<1x128xf32>
    %229 = vector.extract_strided_slice %21 {offsets = [36, 0], sizes = [1, 128], strides = [1, 1]} : vector<64x128xf32> to vector<1x128xf32>
    %230 = arith.mulf %183, %229 : vector<1x128xf32>
    %231 = arith.addf %228, %230 : vector<1x128xf32>
    %232 = vector.extract_strided_slice %21 {offsets = [39, 0], sizes = [1, 128], strides = [1, 1]} : vector<64x128xf32> to vector<1x128xf32>
    %233 = arith.mulf %195, %232 : vector<1x128xf32>
    %234 = arith.addf %231, %233 : vector<1x128xf32>
    %235 = vector.extract_strided_slice %21 {offsets = [42, 0], sizes = [1, 128], strides = [1, 1]} : vector<64x128xf32> to vector<1x128xf32>
    %236 = arith.mulf %207, %235 : vector<1x128xf32>
    %237 = arith.addf %234, %236 : vector<1x128xf32>
    %238 = tpu.concatenate %217, %227, %237 in 0 : vector<1x128xf32>, vector<1x128xf32>, vector<1x128xf32> -> vector<3x128xf32>
    %239 = arith.negf %238 : vector<3x128xf32>
    %240 = math.exp %239 : vector<3x128xf32>
    %cst_45 = arith.constant 1.000000e+00 : f32
    %241 = vector.broadcast %cst_45 : f32 to vector<3x128xf32>
    %242 = arith.addf %241, %240 : vector<3x128xf32>
    %243 = arith.divf %241, %242 : vector<3x128xf32>
    %c0_46 = arith.constant 0 : index
    %c0_47 = arith.constant 0 : index
    %244 = vector.load %arg5[%c0_46, %c0_47] : memref<3x128xf32, #tpu.memory_space<vmem>>, vector<3x128xf32>
    tpu.vector_store %arg5[%c0_46, %c0_47], %243 {strides = array<i32>} : memref<3x128xf32, #tpu.memory_space<vmem>>, vector<3x128xf32>,
    return
  }
  func.func @transform_0(%arg0: i32) -> (i32, i32) {
    %c0_i32 = arith.constant 0 : i32
    %c0_i32_0 = arith.constant 0 : i32
    return %c0_i32, %arg0 : i32, i32
  }
  func.func @transform_1(%arg0: i32) -> (i32, i32) {
    %c0_i32 = arith.constant 0 : i32
    %c0_i32_0 = arith.constant 0 : i32
    return %c0_i32, %arg0 : i32, i32
  }
  func.func @transform_2(%arg0: i32) -> (i32, i32) {
    %c0_i32 = arith.constant 0 : i32
    %c0_i32_0 = arith.constant 0 : i32
    %c0_i32_1 = arith.constant 0 : i32
    return %c0_i32, %c0_i32_0 : i32, i32
  }
  func.func @transform_3(%arg0: i32) -> (i32, i32) {
    %c0_i32 = arith.constant 0 : i32
    %c0_i32_0 = arith.constant 0 : i32
    %c0_i32_1 = arith.constant 0 : i32
    return %c0_i32, %c0_i32_0 : i32, i32
  }
  func.func @transform_4(%arg0: i32) -> (i32, i32) {
    %c0_i32 = arith.constant 0 : i32
    %c0_i32_0 = arith.constant 0 : i32
    return %c0_i32, %arg0 : i32, i32
  }
}

</mosaic_0001>

<llo_original>
// kernel: hash1sh_forward.1
$region0: #{hash1sh_forward.1}
  #allocation0 [shape = 'u32[]', space=smem, size = 0x4, offset = 0x4, fixed_abs, tag = 'smem constant byte address 0x4 - core index']
  #allocation1 [shape = 'u32[144,128]{1,0:T(1,128)}', space=vmem, size = 0x12000, scoped, tag = 'internal scratch']
  %s0 = inlined_call_operand.vmem [shape: bf16[64,256], index: 0, kind: input, shape index: {}]
  %s1 = inlined_call_operand.vmem [shape: f32[3,256], index: 1, kind: input, shape index: {}]
  %s2 = inlined_call_operand.vmem [shape: bf16[192,64], index: 2, kind: input, shape index: {}]
  %s3 = inlined_call_operand.vmem [shape: f32[64,3], index: 3, kind: input, shape index: {}]
  %s4 = inlined_call_operand.hbm [shape: f32[3,256], index: 4, kind: output, shape index: {}]
  %s5 = sld [smem:[#allocation0]]
  $region90: #{hash1sh_forward.1} parent=0
    _
  %s7 = ssub.s32 1, %s5
  %s8 = scalar_select 0, %s7, %s5
  $region1: #{hash1sh_forward.1} parent=0
    #allocation2 [shape = 'u8[32768]{0}', space=vmem, size = 0x8000, scoped, tag = 'input window, operand 0']
    #allocation3 [shape = 'u8[4096]{0}', space=vmem, size = 0x1000, scoped, tag = 'output window, operand 0']
    #allocation4 [shape = 's32[2]{0}', space=sflag, size = 0x8, scoped, tag = 'scoped memory for hash1sh_forward.1']
    %9 = vsyncpa [#allocation4], 0
    %s10 = scalar_lea.sflag [#allocation4], 1
    %11 = vsyncpa %s10, 0
    loop: start=0, step=1, limit=4
    $region2: #{hash1sh_forward.1} parent=1 // loop_pre_header
      _
    $region3: #{hash1sh_forward.1} parent=1 // loop_header
      %s13 = sphi 0, %s17
      %p14 = scmp.ge.s32.totalorder %s13, 4
      %s23 = sphi 0, %s25
      %s26 = sphi 0, %s23
      %s27 = sphi 0, %s26
      %s43 = sphi 0, %s27
      %s49 = sphi 0, %s51
      %s52 = sphi 0, %s49
      %s53 = sphi 0, %s52
      %s69 = sphi 0, %s53
      %s73 = sphi 0, %s73
      %s75 = sphi 0, %s73
      %s76 = sphi 0, %s75
      %s90 = sphi 0, %s76
      %s94 = sphi 0, %s94
      %s96 = sphi 0, %s94
      %s97 = sphi 0, %s96
      %s111 = sphi 0, %s97
      %s117 = sphi 0, %s119
      %s120 = sphi 0, %s117
      %s121 = sphi 0, %s120
      %s137 = sphi 0, %s121
    $region4: #{hash1sh_forward.1} parent=1 // loop_header_branch
      %16 = sbr.rel (%p14) target = $region8
    $region5: #{hash1sh_forward.1} parent=1 // loop_body
      %s18 = ssub.s32 %s13, 1
      %s19 = ssub.s32 %s13, 2
      %s20 = sadd.s32 %s13, 1
      %s21 = ssub.s32 %s13, %s20
      %p22 = scmp.eq.s32.totalorder %s21, 0
      %s24 = sadd.s32 %s23, 1
      %s25 = scalar_select %p22, %s23, %s24
      %p28 = pneg %p22
      %p29 = scmp.eq.s32.totalorder %s13, 1
      %p30 = por %p28, %p29
      %p31 = scmp.ne.s32.totalorder %s23, %s26
      %p32 = scmp.eq.s32.totalorder %s13, 0
      %p33 = por %p31, %p32
      %p34 = scmp.ne.s32.totalorder %s23, %s26
      %p35 = scmp.eq.s32.totalorder %s18, 1
      %p36 = por %p34, %p35
      %p37 = scmp.ne.s32.totalorder %s26, %s27
      %p38 = scmp.eq.s32.totalorder %s18, 0
      %p39 = por %p37, %p38
      %p40 = scmp.ne.s32.totalorder %s26, %s27
      %p41 = scmp.eq.s32.totalorder %s19, 1
      %p42 = por %p40, %p41
      %p44 = scmp.ne.s32.totalorder %s27, %s43
      %p45 = scmp.eq.s32.totalorder %s19, 0
      %p46 = por %p44, %p45
      %s47 = ssub.s32 %s13, %s20
      %p48 = scmp.eq.s32.totalorder %s47, 0
      %s50 = sadd.s32 %s49, 1
      %s51 = scalar_select %p48, %s49, %s50
      %p54 = pneg %p48
      %p55 = scmp.eq.s32.totalorder %s13, 1
      %p56 = por %p54, %p55
      %p57 = scmp.ne.s32.totalorder %s49, %s52
      %p58 = scmp.eq.s32.totalorder %s13, 0
      %p59 = por %p57, %p58
      %p60 = scmp.ne.s32.totalorder %s49, %s52
      %p61 = scmp.eq.s32.totalorder %s18, 1
      %p62 = por %p60, %p61
      %p63 = scmp.ne.s32.totalorder %s52, %s53
      %p64 = scmp.eq.s32.totalorder %s18, 0
      %p65 = por %p63, %p64
      %p66 = scmp.ne.s32.totalorder %s52, %s53
      %p67 = scmp.eq.s32.totalorder %s19, 1
      %p68 = por %p66, %p67
      %p70 = scmp.ne.s32.totalorder %s53, %s69
      %p71 = scmp.eq.s32.totalorder %s19, 0
      %p72 = por %p70, %p71
      %s74 = sadd.s32 %s73, 1
      %p77 = scmp.eq.s32.totalorder %s13, 1
      %p78 = scmp.ne.s32.totalorder %s73, %s75
      %p79 = scmp.eq.s32.totalorder %s13, 0
      %p80 = por %p78, %p79
      %p81 = scmp.ne.s32.totalorder %s73, %s75
      %p82 = scmp.eq.s32.totalorder %s18, 1
      %p83 = por %p81, %p82
      %p84 = scmp.ne.s32.totalorder %s75, %s76
      %p85 = scmp.eq.s32.totalorder %s18, 0
      %p86 = por %p84, %p85
      %p87 = scmp.ne.s32.totalorder %s75, %s76
      %p88 = scmp.eq.s32.totalorder %s19, 1
      %p89 = por %p87, %p88
      %p91 = scmp.ne.s32.totalorder %s76, %s90
      %p92 = scmp.eq.s32.totalorder %s19, 0
      %p93 = por %p91, %p92
      %s95 = sadd.s32 %s94, 1
      %p98 = scmp.eq.s32.totalorder %s13, 1
      %p99 = scmp.ne.s32.totalorder %s94, %s96
      %p100 = scmp.eq.s32.totalorder %s13, 0
      %p101 = por %p99, %p100
      %p102 = scmp.ne.s32.totalorder %s94, %s96
      %p103 = scmp.eq.s32.totalorder %s18, 1
      %p104 = por %p102, %p103
      %p105 = scmp.ne.s32.totalorder %s96, %s97
      %p106 = scmp.eq.s32.totalorder %s18, 0
      %p107 = por %p105, %p106
      %p108 = scmp.ne.s32.totalorder %s96, %s97
      %p109 = scmp.eq.s32.totalorder %s19, 1
      %p110 = por %p108, %p109
      %p112 = scmp.ne.s32.totalorder %s97, %s111
      %p113 = scmp.eq.s32.totalorder %s19, 0
      %p114 = por %p112, %p113
      %s115 = ssub.s32 %s13, %s20
      %p116 = scmp.eq.s32.totalorder %s115, 0
      %s118 = sadd.s32 %s117, 1
      %s119 = scalar_select %p116, %s117, %s118
      %p122 = pneg %p116
      %p123 = scmp.eq.s32.totalorder %s13, 1
      %p124 = por %p122, %p123
      %p125 = scmp.ne.s32.totalorder %s117, %s120
      %p126 = scmp.eq.s32.totalorder %s13, 0
      %p127 = por %p125, %p126
      %p128 = scmp.ne.s32.totalorder %s117, %s120
      %p129 = scmp.eq.s32.totalorder %s18, 1
      %p130 = por %p128, %p129
      %p131 = scmp.ne.s32.totalorder %s120, %s121
      %p132 = scmp.eq.s32.totalorder %s18, 0
      %p133 = por %p131, %p132
      %p134 = scmp.ne.s32.totalorder %s120, %s121
      %p135 = scmp.eq.s32.totalorder %s19, 1
      %p136 = por %p134, %p135
      %p138 = scmp.ne.s32.totalorder %s121, %s137
      %p139 = scmp.eq.s32.totalorder %s19, 0
      %p140 = por %p138, %p139
      %p141 = scmp.le.s32.totalorder 1, %s13
      %p142 = scmp.lt.s32.totalorder %s13, 3
      %p143 = pnand %p141, %p142
      %p144 = pneg %p143
      // Predicated region
      $region9: #{hash1sh_forward.1} parent=5 // pred_check
        _
      $region10: #{hash1sh_forward.1} parent=5 // pred_check_branch
        %146 = sbr.rel (%p143) target = $region12
      $region11: #{hash1sh_forward.1} parent=5 // pred_region
        %s147 = ssub.s32 %s13, 1
        // Predicated region
        $region13: #{hash1sh_forward.1} parent=11 // pred_check
          %p148 = pneg %p86
        $region14: #{hash1sh_forward.1} parent=11 // pred_check_branch
          %150 = sbr.rel (%p148) target = $region16
        $region15: #{hash1sh_forward.1} parent=11 // pred_region
          _
        $region16: #{hash1sh_forward.1} parent=11 // pred_fallthru
          _
        // Predicated region
        $region17: #{hash1sh_forward.1} parent=11 // pred_check
          %p151 = pneg %p107
        $region18: #{hash1sh_forward.1} parent=11 // pred_check_branch
          %153 = sbr.rel (%p151) target = $region20
        $region19: #{hash1sh_forward.1} parent=11 // pred_region
          _
        $region20: #{hash1sh_forward.1} parent=11 // pred_fallthru
          _
      $region12: #{hash1sh_forward.1} parent=5 // pred_fallthru
        _
      %p154 = scmp.lt.s32.totalorder %s13, 2
      // Predicated region
      $region21: #{hash1sh_forward.1} parent=5 // pred_check
        %p155 = pneg %p154
      $region22: #{hash1sh_forward.1} parent=5 // pred_check_branch
        %157 = sbr.rel (%p155) target = $region24
      $region23: #{hash1sh_forward.1} parent=5 // pred_region
        // Predicated region
        $region25: #{hash1sh_forward.1} parent=23 // pred_check
          %p158 = pneg %p33
        $region26: #{hash1sh_forward.1} parent=23 // pred_check_branch
          %160 = sbr.rel (%p158) target = $region28
        $region27: #{hash1sh_forward.1} parent=23 // pred_region
          %s161 = sand.u32 %s23, 1
          %s162 = sand.u32 %s23, 1
          %s163 = smul.addr %s162, 32
          %s164 = scalar_lea.vmem [#allocation2], %s163
          %s165 = smul.addr %s13, 4
          %s166 = scalar_lea.vmem %s0, %s165
          // Predicated region
          $region29: #{hash1sh_forward.1} parent=27 // pred_check
            _
          $region30: #{hash1sh_forward.1} parent=27 // pred_check_branch
            %168 = sbr.rel (0) target = $region32
          $region31: #{hash1sh_forward.1} parent=27 // pred_region
            // Predicated region
            $region33: #{hash1sh_forward.1} parent=31 // pred_check
              _
            $region34: #{hash1sh_forward.1} parent=31 // pred_check_branch
              %170 = sbr.rel target = $region36
            $region35: #{hash1sh_forward.1} parent=31 // pred_region
              // Predicated region
              $region48: #{hash1sh_forward.1} parent=35 // pred_check
                _
              $region49: #{hash1sh_forward.1} parent=35 // pred_check_branch
                %199 = sbr.rel (0) target = $region51
              $region50: #{hash1sh_forward.1} parent=35 // pred_region
                loop: start=0, step=1, limit=1
                $region52: #{hash1sh_forward.1} parent=50 // loop_pre_header
                  _
                $region53: #{hash1sh_forward.1} parent=50 // loop_header
                  %s201 = sphi 0, %s205
                  %p202 = scmp.ge.s32.totalorder %s201, 1
                  %s206 = sphi %s166, %s166
                  %s207 = sphi %s164, %s164
                $region54: #{hash1sh_forward.1} parent=50 // loop_header_branch
                  %204 = sbr.rel (%p202) target = $region58
                $region55: #{hash1sh_forward.1} parent=50 // loop_body
                  _
                $region56: #{hash1sh_forward.1} parent=50 // loop_footer
                  %s205 = sadd.s32 1, %s201
                $region57: #{hash1sh_forward.1} parent=50 // loop_footer_branch
                  %200 = sbr.rel target = $region53
                $region58: #{hash1sh_forward.1} parent=50 // loop_exit
                  _
                loop: start=0, step=1, limit=1
                $region59: #{hash1sh_forward.1} parent=50 // loop_pre_header
                  _
                $region60: #{hash1sh_forward.1} parent=50 // loop_header
                  %s210 = sphi 0, %s214
                  %p211 = scmp.ge.s32.totalorder %s210, 1
                  %s215 = sphi %s166, %s166
                  %s216 = sphi %s164, %s164
                $region61: #{hash1sh_forward.1} parent=50 // loop_header_branch
                  %213 = sbr.rel (%p211) target = $region65
                $region62: #{hash1sh_forward.1} parent=50 // loop_body
                  %v217 = vld [vmem:[%s215] sm:$0xf]
                  %218 = vst [vmem:[%s216] sm:$0xf] %v217
                  %v219 = vld [vmem:[%s215 + $0x8] sm:$0xf]
                  %220 = vst [vmem:[%s216 + $0x4] sm:$0xf] %v219
                  %v221 = vld [vmem:[%s215 + $0x10] sm:$0xf]
                  %222 = vst [vmem:[%s216 + $0x8] sm:$0xf] %v221
                  %v223 = vld [vmem:[%s215 + $0x18] sm:$0xf]
                  %224 = vst [vmem:[%s216 + $0xc] sm:$0xf] %v223
                  %v225 = vld [vmem:[%s215 + $0x20] sm:$0xf]
                  %226 = vst [vmem:[%s216 + $0x10] sm:$0xf] %v225
                  %v227 = vld [vmem:[%s215 + $0x28] sm:$0xf]
                  %228 = vst [vmem:[%s216 + $0x14] sm:$0xf] %v227
                  %v229 = vld [vmem:[%s215 + $0x30] sm:$0xf]
                  %230 = vst [vmem:[%s216 + $0x18] sm:$0xf] %v229
                  %v231 = vld [vmem:[%s215 + $0x38] sm:$0xf]
                  %232 = vst [vmem:[%s216 + $0x1c] sm:$0xf] %v231
                $region63: #{hash1sh_forward.1} parent=50 // loop_footer
                  %s214 = sadd.s32 1, %s210
                $region64: #{hash1sh_forward.1} parent=50 // loop_footer_branch
                  %209 = sbr.rel target = $region60
                $region65: #{hash1sh_forward.1} parent=50 // loop_exit
                  _
              $region51: #{hash1sh_forward.1} parent=35 // pred_fallthru
                _
            $region36: #{hash1sh_forward.1} parent=31 // pred_fallthru
              _
            // Predicated region
            $region37: #{hash1sh_forward.1} parent=31 // pred_check
              _
            $region38: #{hash1sh_forward.1} parent=31 // pred_check_branch
              %172 = sbr.rel (0) target = $region40
            $region39: #{hash1sh_forward.1} parent=31 // pred_region
              loop: start=0, step=1, limit=1
              $region41: #{hash1sh_forward.1} parent=39 // loop_pre_header
                _
              $region42: #{hash1sh_forward.1} parent=39 // loop_header
                %s175 = sphi 0, %s179
                %p176 = scmp.ge.s32.totalorder %s175, 1
                %s180 = sphi %s166, %s166
                %s181 = sphi %s164, %s164
              $region43: #{hash1sh_forward.1} parent=39 // loop_header_branch
                %178 = sbr.rel (%p176) target = $region47
              $region44: #{hash1sh_forward.1} parent=39 // loop_body
                %v182 = vld [vmem:[%s180] sm:$0xf]
                %183 = vst [vmem:[%s181] sm:$0xf] %v182
                %v184 = vld [vmem:[%s180 + $0x8] sm:$0xf]
                %185 = vst [vmem:[%s181 + $0x4] sm:$0xf] %v184
                %v186 = vld [vmem:[%s180 + $0x10] sm:$0xf]
                %187 = vst [vmem:[%s181 + $0x8] sm:$0xf] %v186
                %v188 = vld [vmem:[%s180 + $0x18] sm:$0xf]
                %189 = vst [vmem:[%s181 + $0xc] sm:$0xf] %v188
                %v190 = vld [vmem:[%s180 + $0x20] sm:$0xf]
                %191 = vst [vmem:[%s181 + $0x10] sm:$0xf] %v190
                %v192 = vld [vmem:[%s180 + $0x28] sm:$0xf]
                %193 = vst [vmem:[%s181 + $0x14] sm:$0xf] %v192
                %v194 = vld [vmem:[%s180 + $0x30] sm:$0xf]
                %195 = vst [vmem:[%s181 + $0x18] sm:$0xf] %v194
                %v196 = vld [vmem:[%s180 + $0x38] sm:$0xf]
                %197 = vst [vmem:[%s181 + $0x1c] sm:$0xf] %v196
              $region45: #{hash1sh_forward.1} parent=39 // loop_footer
                %s179 = sadd.s32 1, %s175
              $region46: #{hash1sh_forward.1} parent=39 // loop_footer_branch
                %174 = sbr.rel target = $region42
              $region47: #{hash1sh_forward.1} parent=39 // loop_exit
                _
            $region40: #{hash1sh_forward.1} parent=31 // pred_fallthru
              _
          $region32: #{hash1sh_forward.1} parent=27 // pred_fallthru
            _
          %233 = vnop
        $region28: #{hash1sh_forward.1} parent=23 // pred_fallthru
          _
        // Predicated region
        $region66: #{hash1sh_forward.1} parent=23 // pred_check
          %p234 = pneg %p59
        $region67: #{hash1sh_forward.1} parent=23 // pred_check_branch
          %236 = sbr.rel (%p234) target = $region69
        $region68: #{hash1sh_forward.1} parent=23 // pred_region
          %p237 = scmp.lt.s32.totalorder %s13, 1
          %s238 = scalar_select %p237, %s13, 1
          %s239 = smul.addr %s238, 4
          %s240 = scalar_lea.vmem %s1, %s239
        $region69: #{hash1sh_forward.1} parent=23 // pred_fallthru
          _
      $region24: #{hash1sh_forward.1} parent=5 // pred_fallthru
        _
      %p241 = scmp.le.s32.totalorder 1, %s13
      %p242 = scmp.lt.s32.totalorder %s13, 3
      %p243 = pnand %p241, %p242
      %p244 = pneg %p243
      // Predicated region
      $region70: #{hash1sh_forward.1} parent=5 // pred_check
        _
      $region71: #{hash1sh_forward.1} parent=5 // pred_check_branch
        %246 = sbr.rel (%p243) target = $region73
      $region72: #{hash1sh_forward.1} parent=5 // pred_region
        %s247 = ssub.s32 %s13, 1
        %s248 = sand.u32 %s26, 1
        %s249 = sand.u32 %s26, 1
        %s250 = smul.addr %s249, 32
        %s251 = scalar_lea.vmem [#allocation2], %s250
        // Predicated region
        $region74: #{hash1sh_forward.1} parent=72 // pred_check
          %p252 = pneg %p39
        $region75: #{hash1sh_forward.1} parent=72 // pred_check_branch
          %254 = sbr.rel (%p252) target = $region77
        $region76: #{hash1sh_forward.1} parent=72 // pred_region
          _
        $region77: #{hash1sh_forward.1} parent=72 // pred_fallthru
          _
        %s255 = sand.u32 %s26, 1
        %s256 = sand.u32 %s26, 1
        %s257 = smul.addr %s256, 32
        %s258 = scalar_lea.vmem [#allocation2], %s257
        %p259 = pneg %p39
        %p260 = pneg %p36
        %p261 = scmp.lt.s32.totalorder %s18, 1
        %s262 = scalar_select %p261, %s18, 1
        %s263 = smul.addr %s262, 4
        %s264 = scalar_lea.vmem %s1, %s263
        %p265 = pneg %p65
        %p266 = pneg %p62
        %p267 = pneg %p86
        %p268 = pneg %p83
        %p269 = pneg %p107
        %p270 = pneg %p104
        %p271 = pneg %p133
        %p272 = pneg %p130
        %s273 = sand.u32 %s120, 1
        %s274 = scalar_lea.sflag [#allocation4], %s273
        %s275 = sand.u32 %s120, 1
        %s276 = smul.addr %s275, 4
        %s277 = scalar_lea.vmem [#allocation3], %s276
        %p278 = scmp.lt.s32.totalorder %s18, 1
        %s279 = scalar_select %p278, %s18, 1
        %s280 = smul.addr %s279, 4
        %s281 = scalar_lea.vmem %s1, %s280
        %v283 = vld [vmem:[%s251] sm:$0xf]
        %v284 = vld [vmem:[%s251 + $0x4] sm:$0xf]
        %v285 = vld [vmem:[%s251 + $0x8] sm:$0xf]
        %v286 = vld [vmem:[%s251 + $0xc] sm:$0xf]
        %v287 = vld [vmem:[%s251 + $0x10] sm:$0xf]
        %v288 = vld [vmem:[%s251 + $0x14] sm:$0xf]
        %v289 = vld [vmem:[%s251 + $0x18] sm:$0xf]
        %v290 = vld [vmem:[%s251 + $0x1c] sm:$0xf]
        %v291 = vld [vmem:[%s2] sm:$0xf]
        %v292 = vld [vmem:[%s2 + $0x4] sm:$0xf]
        %v293 = vld [vmem:[%s2 + $0x8] sm:$0xf]
        %v294 = vld [vmem:[%s2 + $0xc] sm:$0xf]
        %v295 = vld [vmem:[%s2 + $0x10] sm:$0xf]
        %v296 = vld [vmem:[%s2 + $0x14] sm:$0xf]
        %v297 = vld [vmem:[%s2 + $0x18] sm:$0xf]
        %v298 = vld [vmem:[%s2 + $0x1c] sm:$0xf]
        %v299 = vld [vmem:[%s2 + $0x20] sm:$0xf]
        %v300 = vld [vmem:[%s2 + $0x24] sm:$0xf]
        %v301 = vld [vmem:[%s2 + $0x28] sm:$0xf]
        %v302 = vld [vmem:[%s2 + $0x2c] sm:$0xf]
        %v303 = vld [vmem:[%s2 + $0x30] sm:$0xf]
        %v304 = vld [vmem:[%s2 + $0x34] sm:$0xf]
        %v305 = vld [vmem:[%s2 + $0x38] sm:$0xf]
        %v306 = vld [vmem:[%s2 + $0x3c] sm:$0xf]
        %v307 = vld [vmem:[%s2 + $0x40] sm:$0xf]
        %v308 = vld [vmem:[%s2 + $0x44] sm:$0xf]
        %v309 = vld [vmem:[%s2 + $0x48] sm:$0xf]
        %v310 = vld [vmem:[%s2 + $0x4c] sm:$0xf]
        %v311 = vld [vmem:[%s2 + $0x50] sm:$0xf]
        %v312 = vld [vmem:[%s2 + $0x54] sm:$0xf]
        %v313 = vld [vmem:[%s2 + $0x58] sm:$0xf]
        %v314 = vld [vmem:[%s2 + $0x5c] sm:$0xf]
        %v315 = vld [vmem:[%s3] sm:$0xff]
        %v316 = vld [vmem:[%s3 + $0x8] sm:$0xff]
        %v317 = vld [vmem:[%s3 + $0x10] sm:$0xff]
        %v318 = vld [vmem:[%s3 + $0x18] sm:$0xff]
        %v319 = vld [vmem:[%s3 + $0x20] sm:$0xff]
        %v320 = vld [vmem:[%s3 + $0x28] sm:$0xff]
        %v321 = vld [vmem:[%s3 + $0x30] sm:$0xff]
        %v322 = vld [vmem:[%s3 + $0x38] sm:$0xff]
        %324 = vset.pattern.permute.xlu0 0
        %325 = vperm.xlu0 %324, %v315
        %v326 = vpop.permute.xlu0 %325
        %329 = vset.pattern.permute.xlu0 0
        %330 = vperm.xlu0 %329, %v316
        %v331 = vpop.permute.xlu0 %330
        %334 = vset.pattern.permute.xlu0 0
        %335 = vperm.xlu0 %334, %v317
        %v336 = vpop.permute.xlu0 %335
        %339 = vset.pattern.permute.xlu0 0
        %340 = vperm.xlu0 %339, %v318
        %v341 = vpop.permute.xlu0 %340
        %344 = vset.pattern.permute.xlu0 0
        %345 = vperm.xlu0 %344, %v319
        %v346 = vpop.permute.xlu0 %345
        %349 = vset.pattern.permute.xlu0 0
        %350 = vperm.xlu0 %349, %v320
        %v351 = vpop.permute.xlu0 %350
        %354 = vset.pattern.permute.xlu0 0
        %355 = vperm.xlu0 %354, %v321
        %v356 = vpop.permute.xlu0 %355
        %359 = vset.pattern.permute.xlu0 0
        %360 = vperm.xlu0 %359, %v322
        %v361 = vpop.permute.xlu0 %360
        %v371 = vunpack.c.l.b16 %v291
        %v372 = vunpack.c.l.b16 %v292
        %v373 = vunpack.c.l.b16 %v293
        %v374 = vunpack.c.l.b16 %v294
        %v375 = vunpack.c.l.b16 %v295
        %v376 = vunpack.c.l.b16 %v296
        %v377 = vunpack.c.l.b16 %v297
        %v378 = vunpack.c.l.b16 %v298
        %v379 = vpack.c.b16 %v372, %v371
        %v380 = vpack.c.b16 %v374, %v373
        %v381 = vpack.c.b16 %v376, %v375
        %v382 = vpack.c.b16 %v378, %v377
        %v391 = vunpack.c.l.b16 %v283
        %v392 = vunpack.c.l.b16 %v284
        %v393 = vunpack.c.l.b16 %v285
        %v394 = vunpack.c.l.b16 %v286
        %v395 = vunpack.c.l.b16 %v287
        %v396 = vunpack.c.l.b16 %v288
        %v397 = vunpack.c.l.b16 %v289
        %v398 = vunpack.c.l.b16 %v290
        %v399 = vpack.c.b16 %v392, %v391
        %v400 = vpack.c.b16 %v394, %v393
        %v401 = vpack.c.b16 %v396, %v395
        %v402 = vpack.c.b16 %v398, %v397
        %vm407 = vcmask 523264
        %v409 = vsel %vm407, %v379, 0
        %v412 = vsel %vm407, %v380, 0
        %v415 = vsel %vm407, %v381, 0
        %v418 = vsel %vm407, %v382, 0
        %420 = vmatprep.subr.bf16.mxu0 0
        %421 = vmatpush1.bf16.msra.mxu0 %v399
        %422 = vmatprep.subr.bf16.mxu0 0
        %423 = vmatpush1.bf16.msra.mxu0 %v400
        %424 = vmatprep.subr.bf16.mxu0 0
        %425 = vmatpush1.bf16.msra.mxu0 %v401
        %426 = vmatprep.subr.bf16.mxu0 0
        %427 = vmatpush1.bf16.msra.mxu0 %v402
        %428 = vmatprep.subr.bf16.mxu0 0
        %429 = vmatpush1.bf16.msra.mxu0 0
        %430 = vmatprep.subr.bf16.mxu0 0
        %431 = vmatpush1.bf16.msra.mxu0 0
        %432 = vmatprep.subr.bf16.mxu0 0
        %433 = vmatpush1.bf16.msra.mxu0 0
        %434 = vmatprep.subr.bf16.mxu0 0
        %435 = vmatpush1.bf16.msra.mxu0 0
        %436 = vmatprep.subr.bf16.mxu0 0
        %437 = vmatpush1.bf16.msra.mxu0 0
        %438 = vmatprep.subr.bf16.mxu0 0
        %439 = vmatpush1.bf16.msra.mxu0 0
        %440 = vmatprep.subr.bf16.mxu0 0
        %441 = vmatpush1.bf16.msra.mxu0 0
        %442 = vmatprep.subr.bf16.mxu0 0
        %443 = vmatpush1.bf16.msra.mxu0 0
        %444 = vmatprep.subr.bf16.mxu0 0
        %445 = vmatpush1.bf16.msra.mxu0 0
        %446 = vmatprep.subr.bf16.mxu0 0
        %447 = vmatpush1.bf16.msra.mxu0 0
        %448 = vmatprep.subr.bf16.mxu0 0
        %449 = vmatpush1.bf16.msra.mxu0 0
        %450 = vmatprep.subr.bf16.mxu0 0
        %451 = vmatpush1.bf16.msra.mxu0 0
        %452 = vmatprep.mubr.bf16.mxu0 0
        %453 = vmatmul.mubr.bf16.gmra.mrb[0].mxu0 %v409
        %v454 = vpop.f32.mrb[0].mxu0
        %v455 = vadd.f32 %v326, %v454
        %v456 = vpop.f32.mrb[0].mxu0
        %v457 = vpop.f32.mrb[0].mxu0
        %v458 = vadd.f32 %v331, %v457
        %v459 = vpop.f32.mrb[0].mxu0
        %460 = vmatprep.mubr.bf16.mxu0 0
        %461 = vmatmul.mubr.bf16.gmra.mrb[0].mxu0 %v412
        %v462 = vpop.f32.mrb[0].mxu0
        %v463 = vadd.f32 %v336, %v462
        %v464 = vpop.f32.mrb[0].mxu0
        %v465 = vpop.f32.mrb[0].mxu0
        %v466 = vadd.f32 %v341, %v465
        %v467 = vpop.f32.mrb[0].mxu0
        %468 = vmatprep.mubr.bf16.mxu0 0
        %469 = vmatmul.mubr.bf16.gmra.mrb[0].mxu0 %v415
        %v470 = vpop.f32.mrb[0].mxu0
        %v471 = vadd.f32 %v346, %v470
        %v472 = vpop.f32.mrb[0].mxu0
        %v473 = vpop.f32.mrb[0].mxu0
        %v474 = vadd.f32 %v351, %v473
        %v475 = vpop.f32.mrb[0].mxu0
        %476 = vmatprep.mubr.bf16.mxu0 0
        %477 = vmatmul.mubr.bf16.gmra.mrb[0].mxu0 %v418
        %v478 = vpop.f32.mrb[0].mxu0
        %v479 = vadd.f32 %v356, %v478
        %v480 = vpop.f32.mrb[0].mxu0
        %v481 = vpop.f32.mrb[0].mxu0
        %v482 = vadd.f32 %v361, %v481
        %v483 = vpop.f32.mrb[0].mxu0
        %484 = vdwg.mxu0
        %v485 = vmax.f32 %v455, 0.0
        %v486 = vmax.f32 %v458, 0.0
        %v487 = vmax.f32 %v463, 0.0
        %v488 = vmax.f32 %v466, 0.0
        %v489 = vmax.f32 %v471, 0.0
        %v490 = vmax.f32 %v474, 0.0
        %v491 = vmax.f32 %v479, 0.0
        %v492 = vmax.f32 %v482, 0.0
        %v493 = vpack.c.bf16 %v486, %v485
        %v494 = vpack.c.bf16 %v488, %v487
        %v495 = vpack.c.bf16 %v490, %v489
        %v496 = vpack.c.bf16 %v492, %v491
        %497 = vset.pattern.permute.xlu0 1
        %498 = vperm.xlu0 %497, %v315
        %v499 = vpop.permute.xlu0 %498
        %501 = vset.pattern.permute.xlu0 1
        %502 = vperm.xlu0 %501, %v316
        %v503 = vpop.permute.xlu0 %502
        %505 = vset.pattern.permute.xlu0 1
        %506 = vperm.xlu0 %505, %v317
        %v507 = vpop.permute.xlu0 %506
        %509 = vset.pattern.permute.xlu0 1
        %510 = vperm.xlu0 %509, %v318
        %v511 = vpop.permute.xlu0 %510
        %513 = vset.pattern.permute.xlu0 1
        %514 = vperm.xlu0 %513, %v319
        %v515 = vpop.permute.xlu0 %514
        %517 = vset.pattern.permute.xlu0 1
        %518 = vperm.xlu0 %517, %v320
        %v519 = vpop.permute.xlu0 %518
        %521 = vset.pattern.permute.xlu0 1
        %522 = vperm.xlu0 %521, %v321
        %v523 = vpop.permute.xlu0 %522
        %525 = vset.pattern.permute.xlu0 1
        %526 = vperm.xlu0 %525, %v322
        %v527 = vpop.permute.xlu0 %526
        %v537 = vunpack.c.l.b16 %v299
        %v538 = vunpack.c.l.b16 %v300
        %v539 = vunpack.c.l.b16 %v301
        %v540 = vunpack.c.l.b16 %v302
        %v541 = vunpack.c.l.b16 %v303
        %v542 = vunpack.c.l.b16 %v304
        %v543 = vunpack.c.l.b16 %v305
        %v544 = vunpack.c.l.b16 %v306
        %v545 = vpack.c.b16 %v538, %v537
        %v546 = vpack.c.b16 %v540, %v539
        %v547 = vpack.c.b16 %v542, %v541
        %v548 = vpack.c.b16 %v544, %v543
        %v550 = vsel %vm407, %v545, 0
        %v553 = vsel %vm407, %v546, 0
        %v556 = vsel %vm407, %v547, 0
        %v559 = vsel %vm407, %v548, 0
        %561 = vmatprep.subr.bf16.mxu0 0
        %562 = vmatpush1.bf16.msra.mxu0 %v493
        %563 = vmatprep.subr.bf16.mxu0 0
        %564 = vmatpush1.bf16.msra.mxu0 %v494
        %565 = vmatprep.subr.bf16.mxu0 0
        %566 = vmatpush1.bf16.msra.mxu0 %v495
        %567 = vmatprep.subr.bf16.mxu0 0
        %568 = vmatpush1.bf16.msra.mxu0 %v496
        %569 = vmatprep.subr.bf16.mxu0 0
        %570 = vmatpush1.bf16.msra.mxu0 0
        %571 = vmatprep.subr.bf16.mxu0 0
        %572 = vmatpush1.bf16.msra.mxu0 0
        %573 = vmatprep.subr.bf16.mxu0 0
        %574 = vmatpush1.bf16.msra.mxu0 0
        %575 = vmatprep.subr.bf16.mxu0 0
        %576 = vmatpush1.bf16.msra.mxu0 0
        %577 = vmatprep.subr.bf16.mxu0 0
        %578 = vmatpush1.bf16.msra.mxu0 0
        %579 = vmatprep.subr.bf16.mxu0 0
        %580 = vmatpush1.bf16.msra.mxu0 0
        %581 = vmatprep.subr.bf16.mxu0 0
        %582 = vmatpush1.bf16.msra.mxu0 0
        %583 = vmatprep.subr.bf16.mxu0 0
        %584 = vmatpush1.bf16.msra.mxu0 0
        %585 = vmatprep.subr.bf16.mxu0 0
        %586 = vmatpush1.bf16.msra.mxu0 0
        %587 = vmatprep.subr.bf16.mxu0 0
        %588 = vmatpush1.bf16.msra.mxu0 0
        %589 = vmatprep.subr.bf16.mxu0 0
        %590 = vmatpush1.bf16.msra.mxu0 0
        %591 = vmatprep.subr.bf16.mxu0 0
        %592 = vmatpush1.bf16.msra.mxu0 0
        %593 = vmatprep.mubr.bf16.mxu0 0
        %594 = vmatmul.mubr.bf16.gmra.mrb[0].mxu0 %v550
        %v595 = vpop.f32.mrb[0].mxu0
        %v596 = vadd.f32 %v499, %v595
        %v597 = vpop.f32.mrb[0].mxu0
        %v598 = vpop.f32.mrb[0].mxu0
        %v599 = vadd.f32 %v503, %v598
        %v600 = vpop.f32.mrb[0].mxu0
        %601 = vmatprep.mubr.bf16.mxu0 0
        %602 = vmatmul.mubr.bf16.gmra.mrb[0].mxu0 %v553
        %v603 = vpop.f32.mrb[0].mxu0
        %v604 = vadd.f32 %v507, %v603
        %v605 = vpop.f32.mrb[0].mxu0
        %v606 = vpop.f32.mrb[0].mxu0
        %v607 = vadd.f32 %v511, %v606
        %v608 = vpop.f32.mrb[0].mxu0
        %609 = vmatprep.mubr.bf16.mxu0 0
        %610 = vmatmul.mubr.bf16.gmra.mrb[0].mxu0 %v556
        %v611 = vpop.f32.mrb[0].mxu0
        %v612 = vadd.f32 %v515, %v611
        %v613 = vpop.f32.mrb[0].mxu0
        %v614 = vpop.f32.mrb[0].mxu0
        %v615 = vadd.f32 %v519, %v614
        %v616 = vpop.f32.mrb[0].mxu0
        %617 = vmatprep.mubr.bf16.mxu0 0
        %618 = vmatmul.mubr.bf16.gmra.mrb[0].mxu0 %v559
        %v619 = vpop.f32.mrb[0].mxu0
        %v620 = vadd.f32 %v523, %v619
        %v621 = vpop.f32.mrb[0].mxu0
        %v622 = vpop.f32.mrb[0].mxu0
        %v623 = vadd.f32 %v527, %v622
        %v624 = vpop.f32.mrb[0].mxu0
        %625 = vdwg.mxu0
        %v626 = vmax.f32 %v596, 0.0
        %v627 = vmax.f32 %v599, 0.0
        %v628 = vmax.f32 %v604, 0.0
        %v629 = vmax.f32 %v607, 0.0
        %v630 = vmax.f32 %v612, 0.0
        %v631 = vmax.f32 %v615, 0.0
        %v632 = vmax.f32 %v620, 0.0
        %v633 = vmax.f32 %v623, 0.0
        %v634 = vpack.c.bf16 %v627, %v626
        %v635 = vpack.c.bf16 %v629, %v628
        %v636 = vpack.c.bf16 %v631, %v630
        %v637 = vpack.c.bf16 %v633, %v632
        %638 = vset.pattern.permute.xlu0 2
        %639 = vperm.xlu0 %638, %v315
        %v640 = vpop.permute.xlu0 %639
        %642 = vset.pattern.permute.xlu0 2
        %643 = vperm.xlu0 %642, %v316
        %v644 = vpop.permute.xlu0 %643
        %646 = vset.pattern.permute.xlu0 2
        %647 = vperm.xlu0 %646, %v317
        %v648 = vpop.permute.xlu0 %647
        %650 = vset.pattern.permute.xlu0 2
        %651 = vperm.xlu0 %650, %v318
        %v652 = vpop.permute.xlu0 %651
        %654 = vset.pattern.permute.xlu0 2
        %655 = vperm.xlu0 %654, %v319
        %v656 = vpop.permute.xlu0 %655
        %658 = vset.pattern.permute.xlu0 2
        %659 = vperm.xlu0 %658, %v320
        %v660 = vpop.permute.xlu0 %659
        %662 = vset.pattern.permute.xlu0 2
        %663 = vperm.xlu0 %662, %v321
        %v664 = vpop.permute.xlu0 %663
        %665 = vset.pattern.permute.xlu0 2
        %666 = vperm.xlu0 %665, %v322
        %v667 = vpop.permute.xlu0 %666
        %v676 = vunpack.c.l.b16 %v307
        %v677 = vunpack.c.l.b16 %v308
        %v678 = vunpack.c.l.b16 %v309
        %v679 = vunpack.c.l.b16 %v310
        %v680 = vunpack.c.l.b16 %v311
        %v681 = vunpack.c.l.b16 %v312
        %v682 = vunpack.c.l.b16 %v313
        %v683 = vunpack.c.l.b16 %v314
        %v684 = vpack.c.b16 %v677, %v676
        %v685 = vpack.c.b16 %v679, %v678
        %v686 = vpack.c.b16 %v681, %v680
        %v687 = vpack.c.b16 %v683, %v682
        %v689 = vsel %vm407, %v684, 0
        %v692 = vsel %vm407, %v685, 0
        %v695 = vsel %vm407, %v686, 0
        %v698 = vsel %vm407, %v687, 0
        %700 = vmatprep.subr.bf16.mxu0 0
        %701 = vmatpush1.bf16.msra.mxu0 %v634
        %702 = vmatprep.subr.bf16.mxu0 0
        %703 = vmatpush1.bf16.msra.mxu0 %v635
        %704 = vmatprep.subr.bf16.mxu0 0
        %705 = vmatpush1.bf16.msra.mxu0 %v636
        %706 = vmatprep.subr.bf16.mxu0 0
        %707 = vmatpush1.bf16.msra.mxu0 %v637
        %708 = vmatprep.subr.bf16.mxu0 0
        %709 = vmatpush1.bf16.msra.mxu0 0
        %710 = vmatprep.subr.bf16.mxu0 0
        %711 = vmatpush1.bf16.msra.mxu0 0
        %712 = vmatprep.subr.bf16.mxu0 0
        %713 = vmatpush1.bf16.msra.mxu0 0
        %714 = vmatprep.subr.bf16.mxu0 0
        %715 = vmatpush1.bf16.msra.mxu0 0
        %716 = vmatprep.subr.bf16.mxu0 0
        %717 = vmatpush1.bf16.msra.mxu0 0
        %718 = vmatprep.subr.bf16.mxu0 0
        %719 = vmatpush1.bf16.msra.mxu0 0
        %720 = vmatprep.subr.bf16.mxu0 0
        %721 = vmatpush1.bf16.msra.mxu0 0
        %722 = vmatprep.subr.bf16.mxu0 0
        %723 = vmatpush1.bf16.msra.mxu0 0
        %724 = vmatprep.subr.bf16.mxu0 0
        %725 = vmatpush1.bf16.msra.mxu0 0
        %726 = vmatprep.subr.bf16.mxu0 0
        %727 = vmatpush1.bf16.msra.mxu0 0
        %728 = vmatprep.subr.bf16.mxu0 0
        %729 = vmatpush1.bf16.msra.mxu0 0
        %730 = vmatprep.subr.bf16.mxu0 0
        %731 = vmatpush1.bf16.msra.mxu0 0
        %732 = vmatprep.mubr.bf16.mxu0 0
        %733 = vmatmul.mubr.bf16.gmra.mrb[0].mxu0 %v689
        %v734 = vpop.f32.mrb[0].mxu0
        %v735 = vadd.f32 %v640, %v734
        %v736 = vpop.f32.mrb[0].mxu0
        %v737 = vpop.f32.mrb[0].mxu0
        %v738 = vadd.f32 %v644, %v737
        %v739 = vpop.f32.mrb[0].mxu0
        %740 = vmatprep.mubr.bf16.mxu0 0
        %741 = vmatmul.mubr.bf16.gmra.mrb[0].mxu0 %v692
        %v742 = vpop.f32.mrb[0].mxu0
        %v743 = vadd.f32 %v648, %v742
        %v744 = vpop.f32.mrb[0].mxu0
        %v745 = vpop.f32.mrb[0].mxu0
        %v746 = vadd.f32 %v652, %v745
        %v747 = vpop.f32.mrb[0].mxu0
        %748 = vmatprep.mubr.bf16.mxu0 0
        %749 = vmatmul.mubr.bf16.gmra.mrb[0].mxu0 %v695
        %v750 = vpop.f32.mrb[0].mxu0
        %v751 = vadd.f32 %v656, %v750
        %v752 = vpop.f32.mrb[0].mxu0
        %v753 = vpop.f32.mrb[0].mxu0
        %v754 = vadd.f32 %v660, %v753
        %v755 = vpop.f32.mrb[0].mxu0
        %756 = vmatprep.mubr.bf16.mxu0 0
        %757 = vmatmul.mubr.bf16.gmra.mrb[0].mxu0 %v698
        %v758 = vpop.f32.mrb[0].mxu0
        %v759 = vpop.f32.mrb[0].mxu0
        %v760 = vpop.f32.mrb[0].mxu0
        %v761 = vpop.f32.mrb[0].mxu0
        %762 = vdwg.mxu0
        %v763 = vld [vmem:[%s281] sm:$0x7]
        %v764 = vmul.f32 %v763, %v763
        %v766 = vrot.slane %v764, 1
        %v768 = vadd.f32 %v764, %v766
        %v769 = vrot.slane %v764, 2
        %v771 = vadd.f32 %v768, %v769
        %v772 = vrsqrt.pop %v771
        %v773 = vmul.f32 %v763, %v772
        %v775 = vrot.slane %v772, 7
        %v777 = vmul.f32 %v763, %v775
        %v778 = vrot.slane %v772, 6
        %v780 = vmul.f32 %v763, %v778
        %v781 = vmul.f32 %v773, %v773
        %v782 = vmul.f32 %v777, %v777
        %v783 = vmul.f32 %v780, %v780
        %v785 = vrot.slane %v777, 1
        %v787 = vmul.f32 %v773, %v785
        %v789 = vrot.slane %v780, 1
        %v791 = vmul.f32 %v777, %v789
        %v792 = vrot.slane %v780, 2
        %v794 = vmul.f32 %v773, %v792
        %v795 = vmul.f32 %v735, 0.2820948
        %v796 = vmul.f32 %v777, 0.48860252
        %v797 = vmul.f32 %v796, %v735
        %v799 = vrot.slane %v797, 1
        %v801 = vsub.f32 %v795, %v799
        %v802 = vmul.f32 %v780, 0.48860252
        %v803 = vmul.f32 %v802, %v735
        %v805 = vrot.slane %v803, 2
        %v807 = vadd.f32 %v801, %v805
        %v808 = vmul.f32 %v773, 0.48860252
        %v810 = vrot.slane %v735, 3
        %v812 = vmul.f32 %v808, %v810
        %v813 = vsub.f32 %v807, %v812
        %v814 = vmul.f32 %v787, 1.0925485
        %v815 = vrot.slane %v735, 4
        %v817 = vmul.f32 %v814, %v815
        %v818 = vadd.f32 %v813, %v817
        %v819 = vmul.f32 %v791, -1.0925485
        %v820 = vmul.f32 %v819, %v815
        %v822 = vrot.slane %v820, 1
        %v824 = vadd.f32 %v818, %v822
        %v825 = vmul.f32 %v783, 2.0
        %v827 = vrot.slane %v781, 6
        %v829 = vsub.f32 %v825, %v827
        %v831 = vrot.slane %v782, 7
        %v833 = vsub.f32 %v829, %v831
        %v834 = vmul.f32 %v833, 0.31539157
        %v835 = vmul.f32 %v834, %v815
        %v837 = vrot.slane %v835, 2
        %v839 = vadd.f32 %v824, %v837
        %v840 = vmul.f32 %v794, -1.0925485
        %v841 = vrot.slane %v735, 7
        %v843 = vmul.f32 %v840, %v841
        %v844 = vadd.f32 %v839, %v843
        %v845 = vrot.slane %v782, 1
        %v847 = vsub.f32 %v781, %v845
        %v848 = vmul.f32 %v847, 0.54627424
        %v849 = vmul.f32 %v848, %v738
        %v850 = vadd.f32 %v844, %v849
        %v851 = vmul.f32 %v777, -0.5900436
        %v852 = vmul.f32 %v781, 3.0
        %v853 = vsub.f32 %v852, %v845
        %v855 = vrot.slane %v853, 7
        %v857 = vmul.f32 %v851, %v855
        %v858 = vmul.f32 %v857, %v738
        %v860 = vrot.slane %v858, 1
        %v862 = vadd.f32 %v850, %v860
        %v863 = vmul.f32 %v787, 2.8906114
        %v864 = vmul.f32 %v863, %v792
        %v866 = vrot.slane %v738, 2
        %v868 = vmul.f32 %v864, %v866
        %v869 = vadd.f32 %v862, %v868
        %v870 = vmul.f32 %v777, -0.4570458
        %v871 = vmul.f32 %v783, 4.0
        %v872 = vsub.f32 %v871, %v827
        %v873 = vsub.f32 %v872, %v831
        %v875 = vrot.slane %v873, 1
        %v877 = vmul.f32 %v870, %v875
        %v878 = vmul.f32 %v877, %v866
        %v880 = vrot.slane %v878, 1
        %v882 = vadd.f32 %v869, %v880
        %v883 = vmul.f32 %v780, 0.37317634
        %v885 = vrot.slane %v852, 6
        %v887 = vsub.f32 %v825, %v885
        %v888 = vmul.f32 %v782, 3.0
        %v890 = vrot.slane %v888, 7
        %v892 = vsub.f32 %v887, %v890
        %v893 = vmul.f32 %v883, %v892
        %v894 = vmul.f32 %v893, %v866
        %v896 = vrot.slane %v894, 2
        %v898 = vadd.f32 %v882, %v896
        %v899 = vmul.f32 %v773, -0.4570458
        %v900 = vrot.slane %v873, 2
        %v902 = vmul.f32 %v899, %v900
        %v903 = vrot.slane %v738, 5
        %v905 = vmul.f32 %v902, %v903
        %v906 = vadd.f32 %v898, %v905
        %v907 = vmul.f32 %v780, 1.4453057
        %v909 = vrot.slane %v847, 6
        %v911 = vmul.f32 %v907, %v909
        %v912 = vrot.slane %v738, 4
        %v914 = vmul.f32 %v911, %v912
        %v916 = vrot.slane %v914, 2
        %v918 = vadd.f32 %v906, %v916
        %v919 = vmul.f32 %v773, -0.5900436
        %v920 = vrot.slane %v888, 1
        %v922 = vsub.f32 %v781, %v920
        %v923 = vmul.f32 %v919, %v922
        %v924 = vrot.slane %v738, 7
        %v926 = vmul.f32 %v923, %v924
        %v927 = vadd.f32 %v918, %v926
        %v928 = vmul.f32 %v927, %v743
        %v930 = vrot.slane %v743, 3
        %v932 = vadd.f32 %v928, %v930
        %v933 = vmax.f32 %v932, 0.0
        %v934 = vrot.slane %v743, 1
        %v936 = vmul.f32 %v927, %v934
        %v937 = vrot.slane %v743, 4
        %v939 = vadd.f32 %v936, %v937
        %v940 = vmax.f32 %v939, 0.0
        %v941 = vrot.slane %v743, 2
        %v943 = vmul.f32 %v927, %v941
        %v944 = vrot.slane %v743, 5
        %v946 = vadd.f32 %v943, %v944
        %v947 = vmax.f32 %v946, 0.0
        %v948 = vrot.slane %v743, 6
        %v950 = vmul.f32 %v933, %v948
        %v952 = vrot.slane %v950, 1
        %v954 = vadd.f32 %v746, %v952
        %v956 = vrot.slane %v746, 1
        %v958 = vmul.f32 %v940, %v956
        %v960 = vrot.slane %v958, 1
        %v962 = vadd.f32 %v954, %v960
        %v963 = vrot.slane %v746, 4
        %v965 = vmul.f32 %v947, %v963
        %v967 = vrot.slane %v965, 1
        %v969 = vadd.f32 %v962, %v967
        %v970 = vmax.f32 %v969, 0.0
        %v971 = vrot.slane %v743, 7
        %v973 = vmul.f32 %v933, %v971
        %v974 = vadd.f32 %v751, %v973
        %v975 = vrot.slane %v746, 2
        %v977 = vmul.f32 %v940, %v975
        %v978 = vadd.f32 %v974, %v977
        %v979 = vrot.slane %v746, 5
        %v981 = vmul.f32 %v947, %v979
        %v982 = vadd.f32 %v978, %v981
        %v983 = vmax.f32 %v982, 0.0
        %v984 = vmul.f32 %v933, %v746
        %v986 = vrot.slane %v984, 7
        %v988 = vadd.f32 %v751, %v986
        %v989 = vrot.slane %v746, 3
        %v991 = vmul.f32 %v940, %v989
        %v993 = vrot.slane %v991, 7
        %v995 = vadd.f32 %v988, %v993
        %v996 = vrot.slane %v746, 6
        %v998 = vmul.f32 %v947, %v996
        %v1000 = vrot.slane %v998, 7
        %v1002 = vadd.f32 %v995, %v1000
        %v1003 = vmax.f32 %v1002, 0.0
        %v1005 = vrot.slane %v751, 3
        %v1007 = vmul.f32 %v970, %v1005
        %v1009 = vrot.slane %v1007, 4
        %v1011 = vadd.f32 %v754, %v1009
        %v1012 = vrot.slane %v751, 5
        %v1014 = vmul.f32 %v983, %v1012
        %v1016 = vrot.slane %v1014, 5
        %v1018 = vadd.f32 %v1011, %v1016
        %v1020 = vrot.slane %v754, 7
        %v1022 = vmul.f32 %v1003, %v1020
        %v1024 = vrot.slane %v1022, 6
        %v1026 = vadd.f32 %v1018, %v1024
        %v1027 = vrot.slane %v751, 4
        %v1029 = vmul.f32 %v970, %v1027
        %v1031 = vrot.slane %v1029, 3
        %v1033 = vadd.f32 %v754, %v1031
        %v1034 = vrot.slane %v751, 6
        %v1036 = vmul.f32 %v983, %v1034
        %v1038 = vrot.slane %v1036, 4
        %v1040 = vadd.f32 %v1033, %v1038
        %v1041 = vmul.f32 %v1003, %v754
        %v1043 = vrot.slane %v1041, 5
        %v1045 = vadd.f32 %v1040, %v1043
        %v1046 = vmul.f32 %v970, %v1012
        %v1048 = vrot.slane %v1046, 2
        %v1050 = vadd.f32 %v754, %v1048
        %v1051 = vrot.slane %v751, 7
        %v1053 = vmul.f32 %v983, %v1051
        %v1055 = vrot.slane %v1053, 3
        %v1057 = vadd.f32 %v1050, %v1055
        %v1058 = vrot.slane %v754, 1
        %v1060 = vmul.f32 %v1003, %v1058
        %v1062 = vrot.slane %v1060, 4
        %v1064 = vadd.f32 %v1057, %v1062
        %v1066 = vrot.slane %v1026, 3
        %v1069 = vrot.slane %v1045, 3
        %v1072 = vrot.slane %v1064, 3
        %vm1074 = vcmask 1040384
        %v1075 = vsel %vm1074, %v1066, %v1069
        %vm1076 = vcmask 1041408
        %v1077 = vsel %vm1076, %v1075, %v1072
        %v1078 = vxor.u32 %v1077, 2147483648
        %v1079 = vmul.f32 %v1078, 1.442695
        %v1080 = vpow.pop %v1079
        %v1081 = vadd.f32 %v1080, 1.0
        %v1082 = vrcp.pop %v1081
        %v1083 = vmul.f32 1.0, %v1082
        %1084 = vst [vmem:[%s277] sm:$0x7] %v1083
        %s1085 = sand.u32 %s120, 1
        %s1086 = scalar_lea.sflag [#allocation4], %s1085
        %s1087 = sand.u32 %s120, 1
        %s1088 = smul.addr %s1087, 4
        %s1089 = scalar_lea.vmem [#allocation3], %s1088
        // Predicated region
        $region78: #{hash1sh_forward.1} parent=72 // pred_check
          %p1090 = pneg %p130
        $region79: #{hash1sh_forward.1} parent=72 // pred_check_branch
          %1092 = sbr.rel (%p1090) target = $region81
        $region80: #{hash1sh_forward.1} parent=72 // pred_region
          %s1094 = ssub.s32 64, 64
          %1095 = vsyncadd %s1086, %s1094
          %s1096 = smul.addr %s18, 64
          %s1097 = scalar_lea.hbm %s4, %s1096
          %s1099 = sshll.u32 %s1089, 4
          %s1100 = int_to_ptr.vmem [resolvable:$true] %s1099
          %1102 = dma.vmem_to_hbm [thread:$0]  %s1100, 64, %s1097, %s1086
        $region81: #{hash1sh_forward.1} parent=72 // pred_fallthru
          _
      $region73: #{hash1sh_forward.1} parent=5 // pred_fallthru
        _
      %p1103 = scmp.le.s32.totalorder 2, %s13
      // Predicated region
      $region82: #{hash1sh_forward.1} parent=5 // pred_check
        %p1104 = pneg %p1103
      $region83: #{hash1sh_forward.1} parent=5 // pred_check_branch
        %1106 = sbr.rel (%p1104) target = $region85
      $region84: #{hash1sh_forward.1} parent=5 // pred_region
        %s1107 = ssub.s32 %s13, 2
        // Predicated region
        $region86: #{hash1sh_forward.1} parent=84 // pred_check
          %p1108 = pneg %p136
        $region87: #{hash1sh_forward.1} parent=84 // pred_check_branch
          %1110 = sbr.rel (%p1108) target = $region89
        $region88: #{hash1sh_forward.1} parent=84 // pred_region
          %s1111 = sand.u32 %s121, 1
          %s1112 = scalar_lea.sflag [#allocation4], %s1111
          %s1113 = sand.u32 %s121, 1
          %s1114 = smul.addr %s1113, 4
          %s1115 = scalar_lea.vmem [#allocation3], %s1114
          %1116 = dma.done %s1112, 64
        $region89: #{hash1sh_forward.1} parent=84 // pred_fallthru
          _
      $region85: #{hash1sh_forward.1} parent=5 // pred_fallthru
        _
    $region6: #{hash1sh_forward.1} parent=1 // loop_footer
      %s17 = sadd.s32 1, %s13
    $region7: #{hash1sh_forward.1} parent=1 // loop_footer_branch
      %12 = sbr.rel target = $region3
    $region8: #{hash1sh_forward.1} parent=1 // loop_exit
      _
    %1117 = vsyncpa [#allocation4], 1
    %s1118 = scalar_lea.sflag [#allocation4], 1
    %1119 = vsyncpa %s1118, 1

</llo_original>
